<compile_context>
chip_gen: v7x
topology: tpu7x:2x2x1
jax: 0.10.0
libtpu: 0.0.40
codegen_flags: <defaults>
</compile_context>

<pallas_src>
import functools

import jax
import jax.numpy as jnp
from jax import lax
from jax.experimental import pallas as pl
from jax.experimental.pallas import tpu as pltpu


def _layernorm(x, gamma, beta, eps=1e-5):
    mu = jnp.mean(x, axis=-1, keepdims=True)
    var = jnp.mean((x - mu) ** 2, axis=-1, keepdims=True)
    return (x - mu) * lax.rsqrt(var + eps) * gamma + beta


def _gelu_tanh(x):
    c = 0.7978845608028654  # sqrt(2/pi)
    return 0.5 * x * (1.0 + jnp.tanh(c * (x + 0.044715 * x * x * x)))


def outer_block_kernel(num_heads, seq_len,
                       x_ref, mask_ref, ln_ref,
                       wqkv_ref, bqkv_ref, wo_ref, bo_ref,
                       w1_ref, fb1_ref, w2_ref, fb2_ref,
                       o_ref):
    x = x_ref[...]                       # (N, E) f32, N = BLK_B * T tokens
    N, E = x.shape
    T = seq_len
    H = num_heads
    Dh = E // H
    nb = N // T                          # sequences in this block

    ln = ln_ref[...]                     # (4, E): [g1, b1, g2, b2]
    g1, b1 = ln[0:1, :], ln[1:2, :]
    g2, b2 = ln[2:3, :], ln[3:4, :]

    # ---- LN1 + fused QKV projection over all tokens in the block ----
    xn = _layernorm(x, g1, b1)
    qkv = jnp.dot(xn.astype(jnp.bfloat16), wqkv_ref[...],
                  preferred_element_type=jnp.float32) + bqkv_ref[...]   # (N, 3E) f32
    qkv3 = qkv.reshape(nb, T, 3 * E)     # leading-dim split: layout no-op

    mask = mask_ref[...][None, :, :]     # (1, T, T), finite -1e30 above diagonal

    # ---- per-head attention, batched over the sequences in the block ----
    # 1/sqrt(Dh) is folded into Wq / bq in the wrapper.
    ctx_heads = []
    for h in range(H):
        lo = h * Dh
        qh = qkv3[:, :, lo:lo + Dh].astype(jnp.bfloat16)            # (nb, T, Dh)
        kh = qkv3[:, :, E + lo:E + lo + Dh].astype(jnp.bfloat16)
        vh = qkv3[:, :, 2 * E + lo:2 * E + lo + Dh].astype(jnp.bfloat16)
        s = jnp.einsum('btd,bsd->bts', qh, kh,
                       preferred_element_type=jnp.float32) + mask    # (nb, T, T) f32
        s = s - jnp.max(s, axis=-1, keepdims=True)
        p = jnp.exp(s)
        p = p * pl.reciprocal(jnp.sum(p, axis=-1, keepdims=True), approx=True)
        ctx_heads.append(jnp.einsum('bts,bsd->btd', p.astype(jnp.bfloat16), vh,
                                    preferred_element_type=jnp.float32))  # (nb, T, Dh)
    ctx = jnp.concatenate(ctx_heads, axis=-1).reshape(N, E)          # (N, E) f32

    # ---- single output projection + residual ----
    attn = jnp.dot(ctx.astype(jnp.bfloat16), wo_ref[...],
                   preferred_element_type=jnp.float32) + bo_ref[...]
    x = x + attn

    # ---- LN2 + FFN (Linear -> GELU -> Linear; dropout is identity at eval) ----
    xn2 = _layernorm(x, g2, b2)
    hdn = jnp.dot(xn2.astype(jnp.bfloat16), w1_ref[...],
                  preferred_element_type=jnp.float32) + fb1_ref[...]
    hdn = _gelu_tanh(hdn)
    ffn = jnp.dot(hdn.astype(jnp.bfloat16), w2_ref[...],
                  preferred_element_type=jnp.float32) + fb2_ref[...]
    o_ref[...] = (x + ffn).astype(o_ref.dtype)


def _largest_divisor_le(n, cap):
    d = max(1, min(n, cap))
    while n % d:
        d -= 1
    return d


def prepare_params(*, w_in, b_in, w_out, b_out, g1, b1, g2, b2,
                   w1, fb1, w2, fb2, num_heads, context_len):
    """Pack / pre-transpose PyTorch-convention weights for the kernel.

    w_in: (3E, E) in_proj_weight, b_in: (3E,), w_out: (E, E) out_proj.weight,
    w1: (Eh, E), w2: (E, Eh) FFN weights (PyTorch `y = x @ W.T + b` convention).
    """
    E = g1.shape[0]
    T = context_len
    Dh = E // num_heads
    scale = 1.0 / (Dh ** 0.5)

    wq, wk, wv = w_in[:E], w_in[E:2 * E], w_in[2 * E:]
    bq, bk, bv = b_in[:E], b_in[E:2 * E], b_in[2 * E:]
    # Fold the softmax 1/sqrt(Dh) scale into the query projection (free at runtime).
    wq = wq * scale
    bq = bq * scale

    wqkv_t = jnp.concatenate([wq.T, wk.T, wv.T], axis=1)             # (E, 3E)
    bqkv = jnp.concatenate([bq, bk, bv]).reshape(1, 3 * E)

    # Finite "minus infinity": avoids inf arithmetic / exp(-inf) hazards; identical
    # result for a causal mask (diagonal is always unmasked).
    mask = jnp.where(jnp.triu(jnp.ones((T, T), jnp.bool_), k=1),
                     jnp.float32(-1e30), jnp.float32(0.0)).astype(jnp.float32)

    return dict(
        mask=mask,
        ln=jnp.stack([g1, b1, g2, b2]).astype(jnp.float32),          # (4, E)
        wqkv_t=wqkv_t.astype(jnp.bfloat16),
        bqkv=bqkv.astype(jnp.float32),
        wo_t=w_out.T.astype(jnp.bfloat16),
        bo=b_out.reshape(1, E).astype(jnp.float32),
        w1_t=w1.T.astype(jnp.bfloat16),
        fb1=fb1.reshape(1, -1).astype(jnp.float32),
        w2_t=w2.T.astype(jnp.bfloat16),
        fb2=fb2.reshape(1, E).astype(jnp.float32),
    )


def outer_transformer_block(x, params, num_heads, block_b=128):
    B, T, E = x.shape
    Eh = params["w1_t"].shape[1]

    # Batch-block: BLK_B sequences (BLK_B*T rows) per grid step.
    blk_b = _largest_divisor_le(B, block_b)
    n_rows = blk_b * T
    assert n_rows % 8 == 0 or n_rows == B * T
    grid = (B // blk_b,)

    x2 = x.reshape(B * T, E)             # row-major flatten: free in the wrapper

    def rep(shape):
        nd = len(shape)
        return pl.BlockSpec(shape, lambda i, _n=nd: (0,) * _n)

    in_specs = [
        pl.BlockSpec((n_rows, E), lambda i: (i, 0)),   # x rows
        rep((T, T)),                                   # causal mask
        rep((4, E)),                                   # packed ln1/ln2 gamma, beta
        rep((E, 3 * E)), rep((1, 3 * E)),              # fused Wqkv^T (bf16), bqkv
        rep((E, E)), rep((1, E)),                      # Wo^T (bf16), bo
        rep((E, Eh)), rep((1, Eh)),                    # W1^T (bf16), b1
        rep((Eh, E)), rep((1, E)),                     # W2^T (bf16), b2
    ]
    out_spec = pl.BlockSpec((n_rows, E), lambda i: (i, 0))

    n_tok = B * T
    Dh = E // num_heads
    flops = int(2 * n_tok * E * (3 * E)          # QKV projection
                + 2 * n_tok * E * E              # output projection
                + 4 * n_tok * E * Eh             # FFN
                + 4 * B * num_heads * T * T * Dh)  # scores + PV
    transcendentals = int(B * num_heads * T * T + n_tok * Eh + 2 * n_tok)
    bytes_accessed = int(2 * n_tok * E * 4
                         + (3 * E * E + E * E + 2 * E * Eh) * 2
                         + (4 * E + 3 * E + 2 * E + Eh) * 4 + T * T * 4)

    kernel = functools.partial(outer_block_kernel, num_heads, T)
    out2 = pl.pallas_call(
        kernel,
        out_shape=jax.ShapeDtypeStruct((B * T, E), x.dtype),
        grid=grid,
        in_specs=in_specs,
        out_specs=out_spec,
        compiler_params=pltpu.CompilerParams(dimension_semantics=("parallel",)),
        cost_estimate=pl.CostEstimate(flops=flops,
                                      transcendentals=transcendentals,
                                      bytes_accessed=bytes_accessed),
    )(x2, params["mask"], params["ln"],
      params["wqkv_t"], params["bqkv"],
      params["wo_t"], params["bo"],
      params["w1_t"], params["fb1"],
      params["w2_t"], params["fb2"])
    return out2.reshape(B, T, E)


if __name__ == "__main__":
    B, T, E, H, EXP = 4, 8, 32, 4, 4
    Eh = EXP * E

    key = jax.random.PRNGKey(0)
    ks = jax.random.split(key, 10)

    def rnd(k, shape, scale=0.05):
        return (scale * jax.random.normal(k, shape)).astype(jnp.float32)

    # nn.MultiheadAttention in_proj: W_in is (3E, E); q|k|v = x @ W_in[i]^T + b_in[i]
    w_in = rnd(ks[0], (3 * E, E))
    b_in = rnd(ks[1], (3 * E,))

    params = prepare_params(
        w_in=w_in, b_in=b_in,
        w_out=rnd(ks[2], (E, E)), b_out=rnd(ks[3], (E,)),
        g1=jnp.ones((E,), jnp.float32), b1=jnp.zeros((E,), jnp.float32),
        g2=jnp.ones((E,), jnp.float32), b2=jnp.zeros((E,), jnp.float32),
        w1=rnd(ks[4], (Eh, E)), fb1=rnd(ks[5], (Eh,)),
        w2=rnd(ks[6], (E, Eh)), fb2=rnd(ks[7], (E,)),
        num_heads=H, context_len=T)

    x = rnd(ks[8], (B, T, E), scale=1.0)

    out = outer_transformer_block(x, params, num_heads=H)
    jax.block_until_ready(out)
    assert out.shape == (B, T, E)
    assert bool(jnp.all(jnp.isfinite(out)))
    print("KERNEL_OK")
</pallas_src>

<mosaic_0001>
module attributes {stable_mosaic.version = 11 : i64} {
  func.func @outer_block_kernel(%arg0: i32, %arg1: memref<32x32xf32, #tpu.memory_space<vmem>>, %arg2: memref<8x8xf32, #tpu.memory_space<vmem>>, %arg3: memref<4x32xf32, #tpu.memory_space<vmem>>, %arg4: memref<32x96xbf16, #tpu.memory_space<vmem>>, %arg5: memref<1x96xf32, #tpu.memory_space<vmem>>, %arg6: memref<32x32xbf16, #tpu.memory_space<vmem>>, %arg7: memref<1x32xf32, #tpu.memory_space<vmem>>, %arg8: memref<32x128xbf16, #tpu.memory_space<vmem>>, %arg9: memref<1x128xf32, #tpu.memory_space<vmem>>, %arg10: memref<128x32xbf16, #tpu.memory_space<vmem>>, %arg11: memref<1x32xf32, #tpu.memory_space<vmem>>, %arg12: memref<32x32xf32, #tpu.memory_space<vmem>>) attributes {dimension_semantics = [#tpu.dimension_semantics<parallel>], iteration_bounds = array<i64: 1>, scalar_prefetch = 0 : i64, scratch_operands = 0 : i64, tpu.core_type = #tpu.core_type<tc>, window_params = [{transform_indices = @transform_0, window_bounds = array<i64: 32, 32>}, {pipeline_mode = #tpu.pipeline_mode<synchronous>, transform_indices = @transform_1, window_bounds = array<i64: 8, 8>}, {pipeline_mode = #tpu.pipeline_mode<synchronous>, transform_indices = @transform_2, window_bounds = array<i64: 4, 32>}, {pipeline_mode = #tpu.pipeline_mode<synchronous>, transform_indices = @transform_3, window_bounds = array<i64: 32, 96>}, {pipeline_mode = #tpu.pipeline_mode<synchronous>, transform_indices = @transform_4, window_bounds = array<i64: 1, 96>}, {pipeline_mode = #tpu.pipeline_mode<synchronous>, transform_indices = @transform_5, window_bounds = array<i64: 32, 32>}, {pipeline_mode = #tpu.pipeline_mode<synchronous>, transform_indices = @transform_6, window_bounds = array<i64: 1, 32>}, {pipeline_mode = #tpu.pipeline_mode<synchronous>, transform_indices = @transform_7, window_bounds = array<i64: 32, 128>}, {pipeline_mode = #tpu.pipeline_mode<synchronous>, transform_indices = @transform_8, window_bounds = array<i64: 1, 128>}, {pipeline_mode = #tpu.pipeline_mode<synchronous>, transform_indices = @transform_9, window_bounds = array<i64: 128, 32>}, {pipeline_mode = #tpu.pipeline_mode<synchronous>, transform_indices = @transform_10, window_bounds = array<i64: 1, 32>}, {transform_indices = @transform_11, window_bounds = array<i64: 32, 32>}]} {
    %c0 = arith.constant 0 : index
    %c0_0 = arith.constant 0 : index
    %0 = vector.load %arg1[%c0, %c0_0] : memref<32x32xf32, #tpu.memory_space<vmem>>, vector<32x32xf32>
    %c0_1 = arith.constant 0 : index
    %c0_2 = arith.constant 0 : index
    %1 = vector.load %arg3[%c0_1, %c0_2] : memref<4x32xf32, #tpu.memory_space<vmem>>, vector<4x32xf32>
    %2 = vector.extract_strided_slice %1 {offsets = [0, 0], sizes = [1, 32], strides = [1, 1]} : vector<4x32xf32> to vector<1x32xf32>
    %3 = vector.extract_strided_slice %1 {offsets = [1, 0], sizes = [1, 32], strides = [1, 1]} : vector<4x32xf32> to vector<1x32xf32>
    %4 = vector.extract_strided_slice %1 {offsets = [2, 0], sizes = [1, 32], strides = [1, 1]} : vector<4x32xf32> to vector<1x32xf32>
    %5 = vector.extract_strided_slice %1 {offsets = [3, 0], sizes = [1, 32], strides = [1, 1]} : vector<4x32xf32> to vector<1x32xf32>
    %cst = arith.constant dense<0.000000e+00> : vector<32xf32>
    %6 = vector.multi_reduction <add>, %0, %cst [1] : vector<32x32xf32> to vector<32xf32>
    %7 = vector.shape_cast %6 : vector<32xf32> to vector<32x1xf32>
    %cst_3 = arith.constant 3.200000e+01 : f32
    %8 = vector.broadcast %cst_3 : f32 to vector<32x1xf32>
    %9 = arith.divf %7, %8 : vector<32x1xf32>
    %10 = vector.broadcast %9 : vector<32x1xf32> to vector<32x32xf32>
    %11 = arith.subf %0, %10 : vector<32x32xf32>
    %12 = arith.mulf %11, %11 : vector<32x32xf32>
    %cst_4 = arith.constant dense<0.000000e+00> : vector<32xf32>
    %13 = vector.multi_reduction <add>, %12, %cst_4 [1] : vector<32x32xf32> to vector<32xf32>
    %14 = vector.shape_cast %13 : vector<32xf32> to vector<32x1xf32>
    %cst_5 = arith.constant 3.200000e+01 : f32
    %15 = vector.broadcast %cst_5 : f32 to vector<32x1xf32>
    %16 = arith.divf %14, %15 : vector<32x1xf32>
    %17 = vector.broadcast %9 : vector<32x1xf32> to vector<32x32xf32>
    %18 = arith.subf %0, %17 : vector<32x32xf32>
    %cst_6 = arith.constant 9.99999974E-6 : f32
    %19 = vector.broadcast %cst_6 : f32 to vector<32x1xf32>
    %20 = arith.addf %16, %19 : vector<32x1xf32>
    %21 = math.rsqrt %20 : vector<32x1xf32>
    %22 = vector.broadcast %21 : vector<32x1xf32> to vector<32x32xf32>
    %23 = arith.mulf %18, %22 : vector<32x32xf32>
    %24 = vector.broadcast %2 : vector<1x32xf32> to vector<32x32xf32>
    %25 = arith.mulf %23, %24 : vector<32x32xf32>
    %26 = vector.broadcast %3 : vector<1x32xf32> to vector<32x32xf32>
    %27 = arith.addf %25, %26 : vector<32x32xf32>
    %28 = arith.truncf %27 : vector<32x32xf32> to vector<32x32xbf16>
    %c0_7 = arith.constant 0 : index
    %c0_8 = arith.constant 0 : index
    %29 = vector.load %arg4[%c0_7, %c0_8] : memref<32x96xbf16, #tpu.memory_space<vmem>>, vector<32x96xbf16>
    %cst_9 = arith.constant dense<0.000000e+00> : vector<32x96xf32>
    %30 = tpu.matmul %28, %29, %cst_9 {dimension_numbers = #tpu.dot_dimension_numbers<[1], [0], [0], [1], [0, 0, 1, 1], [], []>} : vector<32x32xbf16>, vector<32x96xbf16>, vector<32x96xf32> -> vector<32x96xf32>
    %c0_10 = arith.constant 0 : index
    %c0_11 = arith.constant 0 : index
    %31 = vector.load %arg5[%c0_10, %c0_11] : memref<1x96xf32, #tpu.memory_space<vmem>>, vector<1x96xf32>
    %32 = vector.broadcast %31 : vector<1x96xf32> to vector<32x96xf32>
    %33 = arith.addf %30, %32 : vector<32x96xf32>
    %34 = vector.shape_cast %33 : vector<32x96xf32> to vector<4x8x96xf32>
    %c0_12 = arith.constant 0 : index
    %c0_13 = arith.constant 0 : index
    %35 = vector.load %arg2[%c0_12, %c0_13] : memref<8x8xf32, #tpu.memory_space<vmem>>, vector<8x8xf32>
    %36 = vector.shape_cast %35 : vector<8x8xf32> to vector<1x8x8xf32>
    %37 = vector.extract_strided_slice %34 {offsets = [0, 0, 0], sizes = [4, 8, 8], strides = [1, 1, 1]} : vector<4x8x96xf32> to vector<4x8x8xf32>
    %38 = arith.truncf %37 : vector<4x8x8xf32> to vector<4x8x8xbf16>
    %39 = vector.extract_strided_slice %34 {offsets = [0, 0, 32], sizes = [4, 8, 8], strides = [1, 1, 1]} : vector<4x8x96xf32> to vector<4x8x8xf32>
    %40 = arith.truncf %39 : vector<4x8x8xf32> to vector<4x8x8xbf16>
    %41 = vector.extract_strided_slice %34 {offsets = [0, 0, 64], sizes = [4, 8, 8], strides = [1, 1, 1]} : vector<4x8x96xf32> to vector<4x8x8xf32>
    %42 = arith.truncf %41 : vector<4x8x8xf32> to vector<4x8x8xbf16>
    "tpu.trace_start"() <{level = 10 : i32, message = "btd,bsd->bts"}> : () -> ()
    %cst_14 = arith.constant dense<0.000000e+00> : vector<4x8x8xf32>
    %43 = tpu.matmul %38, %40, %cst_14 {dimension_numbers = #tpu.dot_dimension_numbers<[2], [2], [1], [1], [0, 0, 0, 1, 1, 1], [0], [0]>} : vector<4x8x8xbf16>, vector<4x8x8xbf16>, vector<4x8x8xf32> -> vector<4x8x8xf32>
    "tpu.trace_stop"() : () -> ()
    %44 = vector.broadcast %36 : vector<1x8x8xf32> to vector<4x8x8xf32>
    %45 = arith.addf %43, %44 : vector<4x8x8xf32>
    %cst_15 = arith.constant dense<0xFF800000> : vector<4x8xf32>
    %46 = vector.multi_reduction <maximumf>, %45, %cst_15 [2] : vector<4x8x8xf32> to vector<4x8xf32>
    %47 = vector.shape_cast %46 : vector<4x8xf32> to vector<4x8x1xf32>
    %48 = vector.broadcast %47 : vector<4x8x1xf32> to vector<4x8x8xf32>
    %49 = arith.subf %45, %48 : vector<4x8x8xf32>
    %50 = math.exp %49 : vector<4x8x8xf32>
    %cst_16 = arith.constant dense<0.000000e+00> : vector<4x8xf32>
    %51 = vector.multi_reduction <add>, %50, %cst_16 [2] : vector<4x8x8xf32> to vector<4x8xf32>
    %52 = vector.shape_cast %51 : vector<4x8xf32> to vector<4x8x1xf32>
    %53 = tpu.reciprocal %52 {approx = true} : vector<4x8x1xf32> -> vector<4x8x1xf32>
    %54 = vector.broadcast %53 : vector<4x8x1xf32> to vector<4x8x8xf32>
    %55 = arith.mulf %50, %54 : vector<4x8x8xf32>
    %56 = arith.truncf %55 : vector<4x8x8xf32> to vector<4x8x8xbf16>
    "tpu.trace_start"() <{level = 10 : i32, message = "bts,bsd->btd"}> : () -> ()
    %cst_17 = arith.constant dense<0.000000e+00> : vector<4x8x8xf32>
    %57 = tpu.matmul %56, %42, %cst_17 {dimension_numbers = #tpu.dot_dimension_numbers<[2], [1], [1], [2], [0, 0, 0, 1, 1, 2], [0], [0]>} : vector<4x8x8xbf16>, vector<4x8x8xbf16>, vector<4x8x8xf32> -> vector<4x8x8xf32>
    "tpu.trace_stop"() : () -> ()
    %58 = vector.extract_strided_slice %34 {offsets = [0, 0, 8], sizes = [4, 8, 8], strides = [1, 1, 1]} : vector<4x8x96xf32> to vector<4x8x8xf32>
    %59 = arith.truncf %58 : vector<4x8x8xf32> to vector<4x8x8xbf16>
    %60 = vector.extract_strided_slice %34 {offsets = [0, 0, 40], sizes = [4, 8, 8], strides = [1, 1, 1]} : vector<4x8x96xf32> to vector<4x8x8xf32>
    %61 = arith.truncf %60 : vector<4x8x8xf32> to vector<4x8x8xbf16>
    %62 = vector.extract_strided_slice %34 {offsets = [0, 0, 72], sizes = [4, 8, 8], strides = [1, 1, 1]} : vector<4x8x96xf32> to vector<4x8x8xf32>
    %63 = arith.truncf %62 : vector<4x8x8xf32> to vector<4x8x8xbf16>
    "tpu.trace_start"() <{level = 10 : i32, message = "btd,bsd->bts"}> : () -> ()
    %cst_18 = arith.constant dense<0.000000e+00> : vector<4x8x8xf32>
    %64 = tpu.matmul %59, %61, %cst_18 {dimension_numbers = #tpu.dot_dimension_numbers<[2], [2], [1], [1], [0, 0, 0, 1, 1, 1], [0], [0]>} : vector<4x8x8xbf16>, vector<4x8x8xbf16>, vector<4x8x8xf32> -> vector<4x8x8xf32>
    "tpu.trace_stop"() : () -> ()
    %65 = vector.broadcast %36 : vector<1x8x8xf32> to vector<4x8x8xf32>
    %66 = arith.addf %64, %65 : vector<4x8x8xf32>
    %cst_19 = arith.constant dense<0xFF800000> : vector<4x8xf32>
    %67 = vector.multi_reduction <maximumf>, %66, %cst_19 [2] : vector<4x8x8xf32> to vector<4x8xf32>
    %68 = vector.shape_cast %67 : vector<4x8xf32> to vector<4x8x1xf32>
    %69 = vector.broadcast %68 : vector<4x8x1xf32> to vector<4x8x8xf32>
    %70 = arith.subf %66, %69 : vector<4x8x8xf32>
    %71 = math.exp %70 : vector<4x8x8xf32>
    %cst_20 = arith.constant dense<0.000000e+00> : vector<4x8xf32>
    %72 = vector.multi_reduction <add>, %71, %cst_20 [2] : vector<4x8x8xf32> to vector<4x8xf32>
    %73 = vector.shape_cast %72 : vector<4x8xf32> to vector<4x8x1xf32>
    %74 = tpu.reciprocal %73 {approx = true} : vector<4x8x1xf32> -> vector<4x8x1xf32>
    %75 = vector.broadcast %74 : vector<4x8x1xf32> to vector<4x8x8xf32>
    %76 = arith.mulf %71, %75 : vector<4x8x8xf32>
    %77 = arith.truncf %76 : vector<4x8x8xf32> to vector<4x8x8xbf16>
    "tpu.trace_start"() <{level = 10 : i32, message = "bts,bsd->btd"}> : () -> ()
    %cst_21 = arith.constant dense<0.000000e+00> : vector<4x8x8xf32>
    %78 = tpu.matmul %77, %63, %cst_21 {dimension_numbers = #tpu.dot_dimension_numbers<[2], [1], [1], [2], [0, 0, 0, 1, 1, 2], [0], [0]>} : vector<4x8x8xbf16>, vector<4x8x8xbf16>, vector<4x8x8xf32> -> vector<4x8x8xf32>
    "tpu.trace_stop"() : () -> ()
    %79 = vector.extract_strided_slice %34 {offsets = [0, 0, 16], sizes = [4, 8, 8], strides = [1, 1, 1]} : vector<4x8x96xf32> to vector<4x8x8xf32>
    %80 = arith.truncf %79 : vector<4x8x8xf32> to vector<4x8x8xbf16>
    %81 = vector.extract_strided_slice %34 {offsets = [0, 0, 48], sizes = [4, 8, 8], strides = [1, 1, 1]} : vector<4x8x96xf32> to vector<4x8x8xf32>
    %82 = arith.truncf %81 : vector<4x8x8xf32> to vector<4x8x8xbf16>
    %83 = vector.extract_strided_slice %34 {offsets = [0, 0, 80], sizes = [4, 8, 8], strides = [1, 1, 1]} : vector<4x8x96xf32> to vector<4x8x8xf32>
    %84 = arith.truncf %83 : vector<4x8x8xf32> to vector<4x8x8xbf16>
    "tpu.trace_start"() <{level = 10 : i32, message = "btd,bsd->bts"}> : () -> ()
    %cst_22 = arith.constant dense<0.000000e+00> : vector<4x8x8xf32>
    %85 = tpu.matmul %80, %82, %cst_22 {dimension_numbers = #tpu.dot_dimension_numbers<[2], [2], [1], [1], [0, 0, 0, 1, 1, 1], [0], [0]>} : vector<4x8x8xbf16>, vector<4x8x8xbf16>, vector<4x8x8xf32> -> vector<4x8x8xf32>
    "tpu.trace_stop"() : () -> ()
    %86 = vector.broadcast %36 : vector<1x8x8xf32> to vector<4x8x8xf32>
    %87 = arith.addf %85, %86 : vector<4x8x8xf32>
    %cst_23 = arith.constant dense<0xFF800000> : vector<4x8xf32>
    %88 = vector.multi_reduction <maximumf>, %87, %cst_23 [2] : vector<4x8x8xf32> to vector<4x8xf32>
    %89 = vector.shape_cast %88 : vector<4x8xf32> to vector<4x8x1xf32>
    %90 = vector.broadcast %89 : vector<4x8x1xf32> to vector<4x8x8xf32>
    %91 = arith.subf %87, %90 : vector<4x8x8xf32>
    %92 = math.exp %91 : vector<4x8x8xf32>
    %cst_24 = arith.constant dense<0.000000e+00> : vector<4x8xf32>
    %93 = vector.multi_reduction <add>, %92, %cst_24 [2] : vector<4x8x8xf32> to vector<4x8xf32>
    %94 = vector.shape_cast %93 : vector<4x8xf32> to vector<4x8x1xf32>
    %95 = tpu.reciprocal %94 {approx = true} : vector<4x8x1xf32> -> vector<4x8x1xf32>
    %96 = vector.broadcast %95 : vector<4x8x1xf32> to vector<4x8x8xf32>
    %97 = arith.mulf %92, %96 : vector<4x8x8xf32>
    %98 = arith.truncf %97 : vector<4x8x8xf32> to vector<4x8x8xbf16>
    "tpu.trace_start"() <{level = 10 : i32, message = "bts,bsd->btd"}> : () -> ()
    %cst_25 = arith.constant dense<0.000000e+00> : vector<4x8x8xf32>
    %99 = tpu.matmul %98, %84, %cst_25 {dimension_numbers = #tpu.dot_dimension_numbers<[2], [1], [1], [2], [0, 0, 0, 1, 1, 2], [0], [0]>} : vector<4x8x8xbf16>, vector<4x8x8xbf16>, vector<4x8x8xf32> -> vector<4x8x8xf32>
    "tpu.trace_stop"() : () -> ()
    %100 = vector.extract_strided_slice %34 {offsets = [0, 0, 24], sizes = [4, 8, 8], strides = [1, 1, 1]} : vector<4x8x96xf32> to vector<4x8x8xf32>
    %101 = arith.truncf %100 : vector<4x8x8xf32> to vector<4x8x8xbf16>
    %102 = vector.extract_strided_slice %34 {offsets = [0, 0, 56], sizes = [4, 8, 8], strides = [1, 1, 1]} : vector<4x8x96xf32> to vector<4x8x8xf32>
    %103 = arith.truncf %102 : vector<4x8x8xf32> to vector<4x8x8xbf16>
    %104 = vector.extract_strided_slice %34 {offsets = [0, 0, 88], sizes = [4, 8, 8], strides = [1, 1, 1]} : vector<4x8x96xf32> to vector<4x8x8xf32>
    %105 = arith.truncf %104 : vector<4x8x8xf32> to vector<4x8x8xbf16>
    "tpu.trace_start"() <{level = 10 : i32, message = "btd,bsd->bts"}> : () -> ()
    %cst_26 = arith.constant dense<0.000000e+00> : vector<4x8x8xf32>
    %106 = tpu.matmul %101, %103, %cst_26 {dimension_numbers = #tpu.dot_dimension_numbers<[2], [2], [1], [1], [0, 0, 0, 1, 1, 1], [0], [0]>} : vector<4x8x8xbf16>, vector<4x8x8xbf16>, vector<4x8x8xf32> -> vector<4x8x8xf32>
    "tpu.trace_stop"() : () -> ()
    %107 = vector.broadcast %36 : vector<1x8x8xf32> to vector<4x8x8xf32>
    %108 = arith.addf %106, %107 : vector<4x8x8xf32>
    %cst_27 = arith.constant dense<0xFF800000> : vector<4x8xf32>
    %109 = vector.multi_reduction <maximumf>, %108, %cst_27 [2] : vector<4x8x8xf32> to vector<4x8xf32>
    %110 = vector.shape_cast %109 : vector<4x8xf32> to vector<4x8x1xf32>
    %111 = vector.broadcast %110 : vector<4x8x1xf32> to vector<4x8x8xf32>
    %112 = arith.subf %108, %111 : vector<4x8x8xf32>
    %113 = math.exp %112 : vector<4x8x8xf32>
    %cst_28 = arith.constant dense<0.000000e+00> : vector<4x8xf32>
    %114 = vector.multi_reduction <add>, %113, %cst_28 [2] : vector<4x8x8xf32> to vector<4x8xf32>
    %115 = vector.shape_cast %114 : vector<4x8xf32> to vector<4x8x1xf32>
    %116 = tpu.reciprocal %115 {approx = true} : vector<4x8x1xf32> -> vector<4x8x1xf32>
    %117 = vector.broadcast %116 : vector<4x8x1xf32> to vector<4x8x8xf32>
    %118 = arith.mulf %113, %117 : vector<4x8x8xf32>
    %119 = arith.truncf %118 : vector<4x8x8xf32> to vector<4x8x8xbf16>
    "tpu.trace_start"() <{level = 10 : i32, message = "bts,bsd->btd"}> : () -> ()
    %cst_29 = arith.constant dense<0.000000e+00> : vector<4x8x8xf32>
    %120 = tpu.matmul %119, %105, %cst_29 {dimension_numbers = #tpu.dot_dimension_numbers<[2], [1], [1], [2], [0, 0, 0, 1, 1, 2], [0], [0]>} : vector<4x8x8xbf16>, vector<4x8x8xbf16>, vector<4x8x8xf32> -> vector<4x8x8xf32>
    "tpu.trace_stop"() : () -> ()
    %121 = tpu.concatenate %57, %78, %99, %120 in 2 : vector<4x8x8xf32>, vector<4x8x8xf32>, vector<4x8x8xf32>, vector<4x8x8xf32> -> vector<4x8x32xf32>
    %122 = vector.shape_cast %121 : vector<4x8x32xf32> to vector<32x32xf32>
    %123 = arith.truncf %122 : vector<32x32xf32> to vector<32x32xbf16>
    %c0_30 = arith.constant 0 : index
    %c0_31 = arith.constant 0 : index
    %124 = vector.load %arg6[%c0_30, %c0_31] : memref<32x32xbf16, #tpu.memory_space<vmem>>, vector<32x32xbf16>
    %cst_32 = arith.constant dense<0.000000e+00> : vector<32x32xf32>
    %125 = tpu.matmul %123, %124, %cst_32 {dimension_numbers = #tpu.dot_dimension_numbers<[1], [0], [0], [1], [0, 0, 1, 1], [], []>} : vector<32x32xbf16>, vector<32x32xbf16>, vector<32x32xf32> -> vector<32x32xf32>
    %c0_33 = arith.constant 0 : index
    %c0_34 = arith.constant 0 : index
    %126 = vector.load %arg7[%c0_33, %c0_34] : memref<1x32xf32, #tpu.memory_space<vmem>>, vector<1x32xf32>
    %127 = vector.broadcast %126 : vector<1x32xf32> to vector<32x32xf32>
    %128 = arith.addf %125, %127 : vector<32x32xf32>
    %129 = arith.addf %0, %128 : vector<32x32xf32>
    %cst_35 = arith.constant dense<0.000000e+00> : vector<32xf32>
    %130 = vector.multi_reduction <add>, %129, %cst_35 [1] : vector<32x32xf32> to vector<32xf32>
    %131 = vector.shape_cast %130 : vector<32xf32> to vector<32x1xf32>
    %cst_36 = arith.constant 3.200000e+01 : f32
    %132 = vector.broadcast %cst_36 : f32 to vector<32x1xf32>
    %133 = arith.divf %131, %132 : vector<32x1xf32>
    %134 = vector.broadcast %133 : vector<32x1xf32> to vector<32x32xf32>
    %135 = arith.subf %129, %134 : vector<32x32xf32>
    %136 = arith.mulf %135, %135 : vector<32x32xf32>
    %cst_37 = arith.constant dense<0.000000e+00> : vector<32xf32>
    %137 = vector.multi_reduction <add>, %136, %cst_37 [1] : vector<32x32xf32> to vector<32xf32>
    %138 = vector.shape_cast %137 : vector<32xf32> to vector<32x1xf32>
    %cst_38 = arith.constant 3.200000e+01 : f32
    %139 = vector.broadcast %cst_38 : f32 to vector<32x1xf32>
    %140 = arith.divf %138, %139 : vector<32x1xf32>
    %141 = vector.broadcast %133 : vector<32x1xf32> to vector<32x32xf32>
    %142 = arith.subf %129, %141 : vector<32x32xf32>
    %cst_39 = arith.constant 9.99999974E-6 : f32
    %143 = vector.broadcast %cst_39 : f32 to vector<32x1xf32>
    %144 = arith.addf %140, %143 : vector<32x1xf32>
    %145 = math.rsqrt %144 : vector<32x1xf32>
    %146 = vector.broadcast %145 : vector<32x1xf32> to vector<32x32xf32>
    %147 = arith.mulf %142, %146 : vector<32x32xf32>
    %148 = vector.broadcast %4 : vector<1x32xf32> to vector<32x32xf32>
    %149 = arith.mulf %147, %148 : vector<32x32xf32>
    %150 = vector.broadcast %5 : vector<1x32xf32> to vector<32x32xf32>
    %151 = arith.addf %149, %150 : vector<32x32xf32>
    %152 = arith.truncf %151 : vector<32x32xf32> to vector<32x32xbf16>
    %c0_40 = arith.constant 0 : index
    %c0_41 = arith.constant 0 : index
    %153 = vector.load %arg8[%c0_40, %c0_41] : memref<32x128xbf16, #tpu.memory_space<vmem>>, vector<32x128xbf16>
    %cst_42 = arith.constant dense<0.000000e+00> : vector<32x128xf32>
    %154 = tpu.matmul %152, %153, %cst_42 {dimension_numbers = #tpu.dot_dimension_numbers<[1], [0], [0], [1], [0, 0, 1, 1], [], []>} : vector<32x32xbf16>, vector<32x128xbf16>, vector<32x128xf32> -> vector<32x128xf32>
    %c0_43 = arith.constant 0 : index
    %c0_44 = arith.constant 0 : index
    %155 = vector.load %arg9[%c0_43, %c0_44] : memref<1x128xf32, #tpu.memory_space<vmem>>, vector<1x128xf32>
    %156 = vector.broadcast %155 : vector<1x128xf32> to vector<32x128xf32>
    %157 = arith.addf %154, %156 : vector<32x128xf32>
    %cst_45 = arith.constant 5.000000e-01 : f32
    %158 = vector.broadcast %cst_45 : f32 to vector<32x128xf32>
    %159 = arith.mulf %158, %157 : vector<32x128xf32>
    %cst_46 = arith.constant 4.471500e-02 : f32
    %160 = vector.broadcast %cst_46 : f32 to vector<32x128xf32>
    %161 = arith.mulf %160, %157 : vector<32x128xf32>
    %162 = arith.mulf %161, %157 : vector<32x128xf32>
    %163 = arith.mulf %162, %157 : vector<32x128xf32>
    %164 = arith.addf %157, %163 : vector<32x128xf32>
    %cst_47 = arith.constant 0.797884583 : f32
    %165 = vector.broadcast %cst_47 : f32 to vector<32x128xf32>
    %166 = arith.mulf %165, %164 : vector<32x128xf32>
    %167 = math.tanh %166 : vector<32x128xf32>
    %cst_48 = arith.constant 1.000000e+00 : f32
    %168 = vector.broadcast %cst_48 : f32 to vector<32x128xf32>
    %169 = arith.addf %168, %167 : vector<32x128xf32>
    %170 = arith.mulf %159, %169 : vector<32x128xf32>
    %171 = arith.truncf %170 : vector<32x128xf32> to vector<32x128xbf16>
    %c0_49 = arith.constant 0 : index
    %c0_50 = arith.constant 0 : index
    %172 = vector.load %arg10[%c0_49, %c0_50] : memref<128x32xbf16, #tpu.memory_space<vmem>>, vector<128x32xbf16>
    %cst_51 = arith.constant dense<0.000000e+00> : vector<32x32xf32>
    %173 = tpu.matmul %171, %172, %cst_51 {dimension_numbers = #tpu.dot_dimension_numbers<[1], [0], [0], [1], [0, 0, 1, 1], [], []>} : vector<32x128xbf16>, vector<128x32xbf16>, vector<32x32xf32> -> vector<32x32xf32>
    %c0_52 = arith.constant 0 : index
    %c0_53 = arith.constant 0 : index
    %174 = vector.load %arg11[%c0_52, %c0_53] : memref<1x32xf32, #tpu.memory_space<vmem>>, vector<1x32xf32>
    %175 = vector.broadcast %174 : vector<1x32xf32> to vector<32x32xf32>
    %176 = arith.addf %173, %175 : vector<32x32xf32>
    %177 = arith.addf %129, %176 : vector<32x32xf32>
    %c0_54 = arith.constant 0 : index
    %c0_55 = arith.constant 0 : index
    %178 = vector.load %arg12[%c0_54, %c0_55] : memref<32x32xf32, #tpu.memory_space<vmem>>, vector<32x32xf32>
    tpu.vector_store %arg12[%c0_54, %c0_55], %177 {strides = array<i32>} : memref<32x32xf32, #tpu.memory_space<vmem>>, vector<32x32xf32>,
    return
  }
  func.func @transform_0(%arg0: i32) -> (i32, i32) {
    %c0_i32 = arith.constant 0 : i32
    %c0_i32_0 = arith.constant 0 : i32
    return %arg0, %c0_i32 : i32, i32
  }
  func.func @transform_1(%arg0: i32) -> (i32, i32) {
    %c0_i32 = arith.constant 0 : i32
    %c0_i32_0 = arith.constant 0 : i32
    %c0_i32_1 = arith.constant 0 : i32
    return %c0_i32, %c0_i32_0 : i32, i32
  }
  func.func @transform_2(%arg0: i32) -> (i32, i32) {
    %c0_i32 = arith.constant 0 : i32
    %c0_i32_0 = arith.constant 0 : i32
    %c0_i32_1 = arith.constant 0 : i32
    return %c0_i32, %c0_i32_0 : i32, i32
  }
  func.func @transform_3(%arg0: i32) -> (i32, i32) {
    %c0_i32 = arith.constant 0 : i32
    %c0_i32_0 = arith.constant 0 : i32
    %c0_i32_1 = arith.constant 0 : i32
    return %c0_i32, %c0_i32_0 : i32, i32
  }
  func.func @transform_4(%arg0: i32) -> (i32, i32) {
    %c0_i32 = arith.constant 0 : i32
    %c0_i32_0 = arith.constant 0 : i32
    %c0_i32_1 = arith.constant 0 : i32
    return %c0_i32, %c0_i32_0 : i32, i32
  }
  func.func @transform_5(%arg0: i32) -> (i32, i32) {
    %c0_i32 = arith.constant 0 : i32
    %c0_i32_0 = arith.constant 0 : i32
    %c0_i32_1 = arith.constant 0 : i32
    return %c0_i32, %c0_i32_0 : i32, i32
  }
  func.func @transform_6(%arg0: i32) -> (i32, i32) {
    %c0_i32 = arith.constant 0 : i32
    %c0_i32_0 = arith.constant 0 : i32
    %c0_i32_1 = arith.constant 0 : i32
    return %c0_i32, %c0_i32_0 : i32, i32
  }
  func.func @transform_7(%arg0: i32) -> (i32, i32) {
    %c0_i32 = arith.constant 0 : i32
    %c0_i32_0 = arith.constant 0 : i32
    %c0_i32_1 = arith.constant 0 : i32
    return %c0_i32, %c0_i32_0 : i32, i32
  }
  func.func @transform_8(%arg0: i32) -> (i32, i32) {
    %c0_i32 = arith.constant 0 : i32
    %c0_i32_0 = arith.constant 0 : i32
    %c0_i32_1 = arith.constant 0 : i32
    return %c0_i32, %c0_i32_0 : i32, i32
  }
  func.func @transform_9(%arg0: i32) -> (i32, i32) {
    %c0_i32 = arith.constant 0 : i32
    %c0_i32_0 = arith.constant 0 : i32
    %c0_i32_1 = arith.constant 0 : i32
    return %c0_i32, %c0_i32_0 : i32, i32
  }
  func.func @transform_10(%arg0: i32) -> (i32, i32) {
    %c0_i32 = arith.constant 0 : i32
    %c0_i32_0 = arith.constant 0 : i32
    %c0_i32_1 = arith.constant 0 : i32
    return %c0_i32, %c0_i32_0 : i32, i32
  }
  func.func @transform_11(%arg0: i32) -> (i32, i32) {
    %c0_i32 = arith.constant 0 : i32
    %c0_i32_0 = arith.constant 0 : i32
    return %arg0, %c0_i32 : i32, i32
  }
}

</mosaic_0001>

<llo_original>
// kernel: tpu_custom_call.1
$region0: #{tpu_custom_call.1}
  #allocation0 [shape = 'u32[]', space=smem, size = 0x4, offset = 0x4, fixed_abs, tag = 'smem constant byte address 0x4 - core index']
  #allocation1 [shape = 'u32[144,128]{1,0:T(1,128)}', space=vmem, size = 0x12000, scoped, tag = 'internal scratch']
  %s0 = inlined_call_operand.vmem [shape: f32[32,32], index: 0, kind: input, shape index: {}]
  %s1 = inlined_call_operand.hbm [shape: f32[8,8], index: 1, kind: input, shape index: {}]
  %s2 = inlined_call_operand.vmem [shape: f32[4,32], index: 2, kind: input, shape index: {}]
  %s3 = inlined_call_operand.vmem [shape: bf16[32,96], index: 3, kind: input, shape index: {}]
  %s4 = inlined_call_operand.vmem [shape: f32[1,96], index: 4, kind: input, shape index: {}]
  %s5 = inlined_call_operand.vmem [shape: bf16[32,32], index: 5, kind: input, shape index: {}]
  %s6 = inlined_call_operand.vmem [shape: f32[1,32], index: 6, kind: input, shape index: {}]
  %s7 = inlined_call_operand.vmem [shape: bf16[32,128], index: 7, kind: input, shape index: {}]
  %s8 = inlined_call_operand.vmem [shape: f32[1,128], index: 8, kind: input, shape index: {}]
  %s9 = inlined_call_operand.vmem [shape: bf16[128,32], index: 9, kind: input, shape index: {}]
  %s10 = inlined_call_operand.vmem [shape: f32[1,32], index: 10, kind: input, shape index: {}]
  %s11 = inlined_call_operand.hbm [shape: f32[32,32], index: 11, kind: output, shape index: {}]
  %s12 = sld [smem:[#allocation0]]
  $region58: #{tpu_custom_call.1} parent=0
    _
  %s14 = ssub.s32 1, %s12
  %s15 = scalar_select 0, %s14, %s12
  $region1: #{tpu_custom_call.1} parent=0
    #allocation2 [shape = 'u8[4096]{0}', space=vmem, size = 0x1000, scoped, tag = 'input window, operand 1, single buffered']
    #allocation3 [shape = 's32[1]{0}', space=sflag, size = 0x4, scoped, tag = 'scoped memory for tpu_custom_call.1']
    #allocation4 [shape = 's32[1]{0}', space=sflag, size = 0x4, scoped, tag = 'scoped memory for tpu_custom_call.1']
    #allocation5 [shape = 'u8[16384]{0}', space=vmem, size = 0x4000, scoped, tag = 'output window, operand 0, single buffered']
    %16 = vsyncpa [#allocation3], 0
    %17 = vsyncpa [#allocation4], 0
    // Predicated region
    $region2: #{tpu_custom_call.1} parent=1 // pred_check
      _
    $region3: #{tpu_custom_call.1} parent=1 // pred_check_branch
      %19 = sbr.rel (0) target = $region5
    $region4: #{tpu_custom_call.1} parent=1 // pred_region
      _
    $region5: #{tpu_custom_call.1} parent=1 // pred_fallthru
      _
    // Predicated region
    $region6: #{tpu_custom_call.1} parent=1 // pred_check
      _
    $region7: #{tpu_custom_call.1} parent=1 // pred_check_branch
      %21 = sbr.rel (0) target = $region9
    $region8: #{tpu_custom_call.1} parent=1 // pred_region
      %s23 = ssub.s32 128, 128
      %24 = vsyncadd [#allocation3], %s23
      %s26 = sshll.u32 [#allocation2], 4
      %s27 = int_to_ptr.vmem [resolvable:$true] %s26
      %29 = dma.hbm_to_vmem [thread:$0]  %s1, 128, %s27, [#allocation3]
    $region9: #{tpu_custom_call.1} parent=1 // pred_fallthru
      _
    // Predicated region
    $region10: #{tpu_custom_call.1} parent=1 // pred_check
      _
    $region11: #{tpu_custom_call.1} parent=1 // pred_check_branch
      %31 = sbr.rel (0) target = $region13
    $region12: #{tpu_custom_call.1} parent=1 // pred_region
      _
    $region13: #{tpu_custom_call.1} parent=1 // pred_fallthru
      _
    // Predicated region
    $region14: #{tpu_custom_call.1} parent=1 // pred_check
      _
    $region15: #{tpu_custom_call.1} parent=1 // pred_check_branch
      %33 = sbr.rel (0) target = $region17
    $region16: #{tpu_custom_call.1} parent=1 // pred_region
      _
    $region17: #{tpu_custom_call.1} parent=1 // pred_fallthru
      _
    // Predicated region
    $region18: #{tpu_custom_call.1} parent=1 // pred_check
      _
    $region19: #{tpu_custom_call.1} parent=1 // pred_check_branch
      %35 = sbr.rel (0) target = $region21
    $region20: #{tpu_custom_call.1} parent=1 // pred_region
      _
    $region21: #{tpu_custom_call.1} parent=1 // pred_fallthru
      _
    // Predicated region
    $region22: #{tpu_custom_call.1} parent=1 // pred_check
      _
    $region23: #{tpu_custom_call.1} parent=1 // pred_check_branch
      %37 = sbr.rel (0) target = $region25
    $region24: #{tpu_custom_call.1} parent=1 // pred_region
      _
    $region25: #{tpu_custom_call.1} parent=1 // pred_fallthru
      _
    // Predicated region
    $region26: #{tpu_custom_call.1} parent=1 // pred_check
      _
    $region27: #{tpu_custom_call.1} parent=1 // pred_check_branch
      %39 = sbr.rel (0) target = $region29
    $region28: #{tpu_custom_call.1} parent=1 // pred_region
      _
    $region29: #{tpu_custom_call.1} parent=1 // pred_fallthru
      _
    // Predicated region
    $region30: #{tpu_custom_call.1} parent=1 // pred_check
      _
    $region31: #{tpu_custom_call.1} parent=1 // pred_check_branch
      %41 = sbr.rel (0) target = $region33
    $region32: #{tpu_custom_call.1} parent=1 // pred_region
      _
    $region33: #{tpu_custom_call.1} parent=1 // pred_fallthru
      _
    // Predicated region
    $region34: #{tpu_custom_call.1} parent=1 // pred_check
      _
    $region35: #{tpu_custom_call.1} parent=1 // pred_check_branch
      %43 = sbr.rel (0) target = $region37
    $region36: #{tpu_custom_call.1} parent=1 // pred_region
      _
    $region37: #{tpu_custom_call.1} parent=1 // pred_fallthru
      _
    // Predicated region
    $region38: #{tpu_custom_call.1} parent=1 // pred_check
      _
    $region39: #{tpu_custom_call.1} parent=1 // pred_check_branch
      %45 = sbr.rel (0) target = $region41
    $region40: #{tpu_custom_call.1} parent=1 // pred_region
      _
    $region41: #{tpu_custom_call.1} parent=1 // pred_fallthru
      _
    // Predicated region
    $region42: #{tpu_custom_call.1} parent=1 // pred_check
      _
    $region43: #{tpu_custom_call.1} parent=1 // pred_check_branch
      %47 = sbr.rel (0) target = $region45
    $region44: #{tpu_custom_call.1} parent=1 // pred_region
      _
    $region45: #{tpu_custom_call.1} parent=1 // pred_fallthru
      _
    // Predicated region
    $region46: #{tpu_custom_call.1} parent=1 // pred_check
      _
    $region47: #{tpu_custom_call.1} parent=1 // pred_check_branch
      %49 = sbr.rel (0) target = $region49
    $region48: #{tpu_custom_call.1} parent=1 // pred_region
      %50 = dma.done [#allocation3], 128
    $region49: #{tpu_custom_call.1} parent=1 // pred_fallthru
      _
    %v52 = vld [vmem:[%s0] sm:$0xff]
    %v53 = vld [vmem:[%s0 + $0x8] sm:$0xff]
    %v54 = vld [vmem:[%s0 + $0x10] sm:$0xff]
    %v55 = vld [vmem:[%s0 + $0x18] sm:$0xff]
    %v56 = vld [vmem:[%s2] sm:$0xf]
    %vm57 = vcmask 261120
    %v58 = vsel %vm57, %v52, 0.0
    %59 = vadd.xlane.f32.xlu0 %v58
    %v60 = vpop.xlane.xlu0 %59
    %v61 = vsel %vm57, %v53, 0.0
    %62 = vadd.xlane.f32.xlu0 %v61
    %v63 = vpop.xlane.xlu0 %62
    %v64 = vsel %vm57, %v54, 0.0
    %65 = vadd.xlane.f32.xlu0 %v64
    %v66 = vpop.xlane.xlu0 %65
    %v67 = vsel %vm57, %v55, 0.0
    %68 = vadd.xlane.f32.xlu0 %v67
    %v69 = vpop.xlane.xlu0 %68
    %v70 = vrcp.pop 32.0
    %v71 = vmul.f32 %v60, %v70
    %v72 = vmul.f32 %v63, %v70
    %v73 = vmul.f32 %v66, %v70
    %v74 = vmul.f32 %v69, %v70
    %v75 = vsub.f32 %v52, %v71
    %v76 = vsub.f32 %v53, %v72
    %v77 = vsub.f32 %v54, %v73
    %v78 = vsub.f32 %v55, %v74
    %v79 = vmul.f32 %v75, %v75
    %v80 = vmul.f32 %v76, %v76
    %v81 = vmul.f32 %v77, %v77
    %v82 = vmul.f32 %v78, %v78
    %v83 = vsel %vm57, %v79, 0.0
    %84 = vadd.xlane.f32.xlu0 %v83
    %v85 = vpop.xlane.xlu0 %84
    %v86 = vsel %vm57, %v80, 0.0
    %87 = vadd.xlane.f32.xlu0 %v86
    %v88 = vpop.xlane.xlu0 %87
    %v89 = vsel %vm57, %v81, 0.0
    %90 = vadd.xlane.f32.xlu0 %v89
    %v91 = vpop.xlane.xlu0 %90
    %v92 = vsel %vm57, %v82, 0.0
    %93 = vadd.xlane.f32.xlu0 %v92
    %v94 = vpop.xlane.xlu0 %93
    %v95 = vmul.f32 %v85, %v70
    %v96 = vmul.f32 %v88, %v70
    %v97 = vmul.f32 %v91, %v70
    %v98 = vmul.f32 %v94, %v70
    %v99 = vadd.f32 %v95, 1e-05
    %v100 = vadd.f32 %v96, 1e-05
    %v101 = vadd.f32 %v97, 1e-05
    %v102 = vadd.f32 %v98, 1e-05
    %v103 = vrsqrt.pop %v99
    %v104 = vrsqrt.pop %v100
    %v105 = vrsqrt.pop %v101
    %v106 = vrsqrt.pop %v102
    %v107 = vmul.f32 %v75, %v103
    %v108 = vmul.f32 %v76, %v104
    %v109 = vmul.f32 %v77, %v105
    %v110 = vmul.f32 %v78, %v106
    %v111 = vlaneseq
    %v112 = vshrl.u32 %v111, 7
    %v113 = vsub.s32 0, %v112
    %v114 = vrot.slane %v56, %v113
    %v115 = vmul.f32 %v107, %v114
    %v116 = vmul.f32 %v108, %v114
    %v117 = vmul.f32 %v109, %v114
    %v118 = vmul.f32 %v110, %v114
    %v119 = vlaneseq
    %v120 = vshrl.u32 %v119, 7
    %v121 = vsub.s32 1, %v120
    %v122 = vrot.slane %v56, %v121
    %v123 = vadd.f32 %v115, %v122
    %v124 = vadd.f32 %v116, %v122
    %v125 = vadd.f32 %v117, %v122
    %v126 = vadd.f32 %v118, %v122
    %v127 = vpack.c.bf16 %v124, %v123
    %v128 = vpack.c.bf16 %v126, %v125
    %v129 = vld [vmem:[%s3] sm:$0xf]
    %v130 = vld [vmem:[%s3 + $0x4] sm:$0xf]
    %v131 = vld [vmem:[%s3 + $0x8] sm:$0xf]
    %v132 = vld [vmem:[%s3 + $0xc] sm:$0xf]
    %v133 = vld [vmem:[%s4] sm:$0x1]
    %v135 = vlaneseq
    %v136 = vshrl.u32 %v135, 7
    %v137 = vsub.s32 0, %v136
    %v138 = vrot.slane %v133, %v137
    %v144 = vunpack.c.l.b16 %v129
    %v145 = vunpack.c.l.b16 %v130
    %v146 = vunpack.c.l.b16 %v131
    %v147 = vunpack.c.l.b16 %v132
    %v148 = vpack.c.b16 %v145, %v144
    %v149 = vpack.c.b16 %v147, %v146
    %v153 = vsel %vm57, %v127, 0
    %v156 = vsel %vm57, %v128, 0
    %158 = vmatprep.subr.bf16.mxu0 0
    %159 = vmatpush1.bf16.msra.mxu0 %v148
    %160 = vmatprep.subr.bf16.mxu0 0
    %161 = vmatpush1.bf16.msra.mxu0 %v149
    %162 = vmatprep.subr.bf16.mxu0 0
    %163 = vmatpush1.bf16.msra.mxu0 0
    %164 = vmatprep.subr.bf16.mxu0 0
    %165 = vmatpush1.bf16.msra.mxu0 0
    %166 = vmatprep.subr.bf16.mxu0 0
    %167 = vmatpush1.bf16.msra.mxu0 0
    %168 = vmatprep.subr.bf16.mxu0 0
    %169 = vmatpush1.bf16.msra.mxu0 0
    %170 = vmatprep.subr.bf16.mxu0 0
    %171 = vmatpush1.bf16.msra.mxu0 0
    %172 = vmatprep.subr.bf16.mxu0 0
    %173 = vmatpush1.bf16.msra.mxu0 0
    %174 = vmatprep.subr.bf16.mxu0 0
    %175 = vmatpush1.bf16.msra.mxu0 0
    %176 = vmatprep.subr.bf16.mxu0 0
    %177 = vmatpush1.bf16.msra.mxu0 0
    %178 = vmatprep.subr.bf16.mxu0 0
    %179 = vmatpush1.bf16.msra.mxu0 0
    %180 = vmatprep.subr.bf16.mxu0 0
    %181 = vmatpush1.bf16.msra.mxu0 0
    %182 = vmatprep.subr.bf16.mxu0 0
    %183 = vmatpush1.bf16.msra.mxu0 0
    %184 = vmatprep.subr.bf16.mxu0 0
    %185 = vmatpush1.bf16.msra.mxu0 0
    %186 = vmatprep.subr.bf16.mxu0 0
    %187 = vmatpush1.bf16.msra.mxu0 0
    %188 = vmatprep.subr.bf16.mxu0 0
    %189 = vmatpush1.bf16.msra.mxu0 0
    %190 = vmatprep.mubr.bf16.mxu0 0
    %191 = vmatmul.mubr.bf16.gmra.mrb[0].mxu0 %v153
    %v192 = vpop.f32.mrb[0].mxu0
    %v193 = vadd.f32 %v138, %v192
    %v194 = vpop.f32.mrb[0].mxu0
    %v195 = vpop.f32.mrb[0].mxu0
    %v196 = vadd.f32 %v138, %v195
    %v197 = vpop.f32.mrb[0].mxu0
    %198 = vmatprep.mubr.bf16.mxu0 0
    %199 = vmatmul.mubr.bf16.gmra.mrb[0].mxu0 %v156
    %v200 = vpop.f32.mrb[0].mxu0
    %v201 = vadd.f32 %v138, %v200
    %v202 = vpop.f32.mrb[0].mxu0
    %v203 = vpop.f32.mrb[0].mxu0
    %v204 = vadd.f32 %v138, %v203
    %v205 = vpop.f32.mrb[0].mxu0
    %206 = vdwg.mxu0
    %v207 = vld [vmem:[#allocation2] sm:$0xff]
    %v208 = vpack.c.bf16 %v193, %v193
    %v209 = vpack.c.bf16 %v196, %v196
    %v210 = vpack.c.bf16 %v201, %v201
    %v211 = vpack.c.bf16 %v204, %v204
    %213 = vrot.lane.b32.xlu0 %v208, 96
    %v214 = vpop.permute.xlu0 %213
    %vm215 = vcmask 64512
    %v217 = vsel %vm215, %v208, 0
    %v220 = vsel %vm215, %v214, 0
    %222 = vmatprep.subr.bf16.mxu0 0
    %223 = vmatpush1.bf16.xpose.msra.mxu0 %v220
    %224 = vmatprep.subr.bf16.mxu0 0
    %225 = vmatpush1.bf16.xpose.msra.mxu0 0
    %226 = vmatprep.subr.bf16.mxu0 0
    %227 = vmatpush1.bf16.xpose.msra.mxu0 0
    %228 = vmatprep.subr.bf16.mxu0 0
    %229 = vmatpush1.bf16.xpose.msra.mxu0 0
    %230 = vmatprep.subr.bf16.mxu0 0
    %231 = vmatpush1.bf16.xpose.msra.mxu0 0
    %232 = vmatprep.subr.bf16.mxu0 0
    %233 = vmatpush1.bf16.xpose.msra.mxu0 0
    %234 = vmatprep.subr.bf16.mxu0 0
    %235 = vmatpush1.bf16.xpose.msra.mxu0 0
    %236 = vmatprep.subr.bf16.mxu0 0
    %237 = vmatpush1.bf16.xpose.msra.mxu0 0
    %238 = vmatprep.subr.bf16.mxu0 0
    %239 = vmatpush1.bf16.xpose.msra.mxu0 0
    %240 = vmatprep.subr.bf16.mxu0 0
    %241 = vmatpush1.bf16.xpose.msra.mxu0 0
    %242 = vmatprep.subr.bf16.mxu0 0
    %243 = vmatpush1.bf16.xpose.msra.mxu0 0
    %244 = vmatprep.subr.bf16.mxu0 0
    %245 = vmatpush1.bf16.xpose.msra.mxu0 0
    %246 = vmatprep.subr.bf16.mxu0 0
    %247 = vmatpush1.bf16.xpose.msra.mxu0 0
    %248 = vmatprep.subr.bf16.mxu0 0
    %249 = vmatpush1.bf16.xpose.msra.mxu0 0
    %250 = vmatprep.subr.bf16.mxu0 0
    %251 = vmatpush1.bf16.xpose.msra.mxu0 0
    %252 = vmatprep.subr.bf16.mxu0 0
    %253 = vmatpush1.bf16.xpose.msra.mxu0 0
    %254 = vmatprep.mubr.bf16.mxu0 0
    %255 = vmatmul.mubr.bf16.gmra.mrb[0].mxu0 %v217
    %v256 = vpop.f32.mrb[0].mxu0
    %v257 = vadd.f32 %v207, %v256
    %v258 = vpop.f32.mrb[0].mxu0
    %v259 = vpop.f32.mrb[0].mxu0
    %v260 = vpop.f32.mrb[0].mxu0
    %261 = vdwg.mxu0
    %263 = vrot.lane.b32.xlu0 %v209, 96
    %v264 = vpop.permute.xlu0 %263
    %v266 = vsel %vm215, %v209, 0
    %v269 = vsel %vm215, %v264, 0
    %271 = vmatprep.subr.bf16.mxu0 0
    %272 = vmatpush1.bf16.xpose.msra.mxu0 %v269
    %273 = vmatprep.subr.bf16.mxu0 0
    %274 = vmatpush1.bf16.xpose.msra.mxu0 0
    %275 = vmatprep.subr.bf16.mxu0 0
    %276 = vmatpush1.bf16.xpose.msra.mxu0 0
    %277 = vmatprep.subr.bf16.mxu0 0
    %278 = vmatpush1.bf16.xpose.msra.mxu0 0
    %279 = vmatprep.subr.bf16.mxu0 0
    %280 = vmatpush1.bf16.xpose.msra.mxu0 0
    %281 = vmatprep.subr.bf16.mxu0 0
    %282 = vmatpush1.bf16.xpose.msra.mxu0 0
    %283 = vmatprep.subr.bf16.mxu0 0
    %284 = vmatpush1.bf16.xpose.msra.mxu0 0
    %285 = vmatprep.subr.bf16.mxu0 0
    %286 = vmatpush1.bf16.xpose.msra.mxu0 0
    %287 = vmatprep.subr.bf16.mxu0 0
    %288 = vmatpush1.bf16.xpose.msra.mxu0 0
    %289 = vmatprep.subr.bf16.mxu0 0
    %290 = vmatpush1.bf16.xpose.msra.mxu0 0
    %291 = vmatprep.subr.bf16.mxu0 0
    %292 = vmatpush1.bf16.xpose.msra.mxu0 0
    %293 = vmatprep.subr.bf16.mxu0 0
    %294 = vmatpush1.bf16.xpose.msra.mxu0 0
    %295 = vmatprep.subr.bf16.mxu0 0
    %296 = vmatpush1.bf16.xpose.msra.mxu0 0
    %297 = vmatprep.subr.bf16.mxu0 0
    %298 = vmatpush1.bf16.xpose.msra.mxu0 0
    %299 = vmatprep.subr.bf16.mxu0 0
    %300 = vmatpush1.bf16.xpose.msra.mxu0 0
    %301 = vmatprep.subr.bf16.mxu0 0
    %302 = vmatpush1.bf16.xpose.msra.mxu0 0
    %303 = vmatprep.mubr.bf16.mxu0 0
    %304 = vmatmul.mubr.bf16.gmra.mrb[0].mxu0 %v266
    %v305 = vpop.f32.mrb[0].mxu0
    %v306 = vadd.f32 %v207, %v305
    %v307 = vpop.f32.mrb[0].mxu0
    %v308 = vpop.f32.mrb[0].mxu0
    %v309 = vpop.f32.mrb[0].mxu0
    %310 = vdwg.mxu0
    %312 = vrot.lane.b32.xlu0 %v210, 96
    %v313 = vpop.permute.xlu0 %312
    %v315 = vsel %vm215, %v210, 0
    %v318 = vsel %vm215, %v313, 0
    %320 = vmatprep.subr.bf16.mxu0 0
    %321 = vmatpush1.bf16.xpose.msra.mxu0 %v318
    %322 = vmatprep.subr.bf16.mxu0 0
    %323 = vmatpush1.bf16.xpose.msra.mxu0 0
    %324 = vmatprep.subr.bf16.mxu0 0
    %325 = vmatpush1.bf16.xpose.msra.mxu0 0
    %326 = vmatprep.subr.bf16.mxu0 0
    %327 = vmatpush1.bf16.xpose.msra.mxu0 0
    %328 = vmatprep.subr.bf16.mxu0 0
    %329 = vmatpush1.bf16.xpose.msra.mxu0 0
    %330 = vmatprep.subr.bf16.mxu0 0
    %331 = vmatpush1.bf16.xpose.msra.mxu0 0
    %332 = vmatprep.subr.bf16.mxu0 0
    %333 = vmatpush1.bf16.xpose.msra.mxu0 0
    %334 = vmatprep.subr.bf16.mxu0 0
    %335 = vmatpush1.bf16.xpose.msra.mxu0 0
    %336 = vmatprep.subr.bf16.mxu0 0
    %337 = vmatpush1.bf16.xpose.msra.mxu0 0
    %338 = vmatprep.subr.bf16.mxu0 0
    %339 = vmatpush1.bf16.xpose.msra.mxu0 0
    %340 = vmatprep.subr.bf16.mxu0 0
    %341 = vmatpush1.bf16.xpose.msra.mxu0 0
    %342 = vmatprep.subr.bf16.mxu0 0
    %343 = vmatpush1.bf16.xpose.msra.mxu0 0
    %344 = vmatprep.subr.bf16.mxu0 0
    %345 = vmatpush1.bf16.xpose.msra.mxu0 0
    %346 = vmatprep.subr.bf16.mxu0 0
    %347 = vmatpush1.bf16.xpose.msra.mxu0 0
    %348 = vmatprep.subr.bf16.mxu0 0
    %349 = vmatpush1.bf16.xpose.msra.mxu0 0
    %350 = vmatprep.subr.bf16.mxu0 0
    %351 = vmatpush1.bf16.xpose.msra.mxu0 0
    %352 = vmatprep.mubr.bf16.mxu0 0
    %353 = vmatmul.mubr.bf16.gmra.mrb[0].mxu0 %v315
    %v354 = vpop.f32.mrb[0].mxu0
    %v355 = vadd.f32 %v207, %v354
    %v356 = vpop.f32.mrb[0].mxu0
    %v357 = vpop.f32.mrb[0].mxu0
    %v358 = vpop.f32.mrb[0].mxu0
    %359 = vdwg.mxu0
    %361 = vrot.lane.b32.xlu0 %v211, 96
    %v362 = vpop.permute.xlu0 %361
    %v364 = vsel %vm215, %v211, 0
    %v367 = vsel %vm215, %v362, 0
    %369 = vmatprep.subr.bf16.mxu0 0
    %370 = vmatpush1.bf16.xpose.msra.mxu0 %v367
    %371 = vmatprep.subr.bf16.mxu0 0
    %372 = vmatpush1.bf16.xpose.msra.mxu0 0
    %373 = vmatprep.subr.bf16.mxu0 0
    %374 = vmatpush1.bf16.xpose.msra.mxu0 0
    %375 = vmatprep.subr.bf16.mxu0 0
    %376 = vmatpush1.bf16.xpose.msra.mxu0 0
    %377 = vmatprep.subr.bf16.mxu0 0
    %378 = vmatpush1.bf16.xpose.msra.mxu0 0
    %379 = vmatprep.subr.bf16.mxu0 0
    %380 = vmatpush1.bf16.xpose.msra.mxu0 0
    %381 = vmatprep.subr.bf16.mxu0 0
    %382 = vmatpush1.bf16.xpose.msra.mxu0 0
    %383 = vmatprep.subr.bf16.mxu0 0
    %384 = vmatpush1.bf16.xpose.msra.mxu0 0
    %385 = vmatprep.subr.bf16.mxu0 0
    %386 = vmatpush1.bf16.xpose.msra.mxu0 0
    %387 = vmatprep.subr.bf16.mxu0 0
    %388 = vmatpush1.bf16.xpose.msra.mxu0 0
    %389 = vmatprep.subr.bf16.mxu0 0
    %390 = vmatpush1.bf16.xpose.msra.mxu0 0
    %391 = vmatprep.subr.bf16.mxu0 0
    %392 = vmatpush1.bf16.xpose.msra.mxu0 0
    %393 = vmatprep.subr.bf16.mxu0 0
    %394 = vmatpush1.bf16.xpose.msra.mxu0 0
    %395 = vmatprep.subr.bf16.mxu0 0
    %396 = vmatpush1.bf16.xpose.msra.mxu0 0
    %397 = vmatprep.subr.bf16.mxu0 0
    %398 = vmatpush1.bf16.xpose.msra.mxu0 0
    %399 = vmatprep.subr.bf16.mxu0 0
    %400 = vmatpush1.bf16.xpose.msra.mxu0 0
    %401 = vmatprep.mubr.bf16.mxu0 0
    %402 = vmatmul.mubr.bf16.gmra.mrb[0].mxu0 %v364
    %v403 = vpop.f32.mrb[0].mxu0
    %v404 = vadd.f32 %v207, %v403
    %v405 = vpop.f32.mrb[0].mxu0
    %v406 = vpop.f32.mrb[0].mxu0
    %v407 = vpop.f32.mrb[0].mxu0
    %408 = vdwg.mxu0
    %v409 = vsel %vm215, %v257, -inf
    %410 = vmax.xlane.f32.xlu0 %v409
    %v411 = vpop.xlane.xlu0 %410
    %v412 = vsel %vm215, %v306, -inf
    %413 = vmax.xlane.f32.xlu0 %v412
    %v414 = vpop.xlane.xlu0 %413
    %v415 = vsel %vm215, %v355, -inf
    %416 = vmax.xlane.f32.xlu0 %v415
    %v417 = vpop.xlane.xlu0 %416
    %v418 = vsel %vm215, %v404, -inf
    %419 = vmax.xlane.f32.xlu0 %v418
    %v420 = vpop.xlane.xlu0 %419
    %v421 = vsub.f32 %v257, %v411
    %v422 = vsub.f32 %v306, %v414
    %v423 = vsub.f32 %v355, %v417
    %v424 = vsub.f32 %v404, %v420
    %v425 = vmul.f32 %v421, 1.442695
    %v426 = vpow.pop %v425
    %v427 = vmul.f32 %v422, 1.442695
    %v428 = vpow.pop %v427
    %v429 = vmul.f32 %v423, 1.442695
    %v430 = vpow.pop %v429
    %v431 = vmul.f32 %v424, 1.442695
    %v432 = vpow.pop %v431
    %v433 = vsel %vm215, %v426, 0.0
    %434 = vadd.xlane.f32.xlu0 %v433
    %v435 = vpop.xlane.xlu0 %434
    %v436 = vsel %vm215, %v428, 0.0
    %437 = vadd.xlane.f32.xlu0 %v436
    %v438 = vpop.xlane.xlu0 %437
    %v439 = vsel %vm215, %v430, 0.0
    %440 = vadd.xlane.f32.xlu0 %v439
    %v441 = vpop.xlane.xlu0 %440
    %v442 = vsel %vm215, %v432, 0.0
    %443 = vadd.xlane.f32.xlu0 %v442
    %v444 = vpop.xlane.xlu0 %443
    %v445 = vrcp.pop %v435
    %v446 = vrcp.pop %v438
    %v447 = vrcp.pop %v441
    %v448 = vrcp.pop %v444
    %v449 = vmul.f32 %v426, %v445
    %v450 = vmul.f32 %v428, %v446
    %v451 = vmul.f32 %v430, %v447
    %v452 = vmul.f32 %v432, %v448
    %v453 = vpack.c.bf16 %v449, %v449
    %v454 = vpack.c.bf16 %v450, %v450
    %v455 = vpack.c.bf16 %v451, %v451
    %v456 = vpack.c.bf16 %v452, %v452
    %457 = vrot.lane.b32.xlu0 %v208, 64
    %v458 = vpop.permute.xlu0 %457
    %v460 = vsel %vm215, %v453, 0
    %vm462 = vcmask 1043456
    %v464 = vsel %vm462, %v458, 0
    %466 = vmatprep.subr.bf16.mxu0 0
    %467 = vmatpush1.bf16.msra.mxu0 %v464
    %468 = vmatprep.subr.bf16.mxu0 0
    %469 = vmatpush1.bf16.msra.mxu0 0
    %470 = vmatprep.subr.bf16.mxu0 0
    %471 = vmatpush1.bf16.msra.mxu0 0
    %472 = vmatprep.subr.bf16.mxu0 0
    %473 = vmatpush1.bf16.msra.mxu0 0
    %474 = vmatprep.subr.bf16.mxu0 0
    %475 = vmatpush1.bf16.msra.mxu0 0
    %476 = vmatprep.subr.bf16.mxu0 0
    %477 = vmatpush1.bf16.msra.mxu0 0
    %478 = vmatprep.subr.bf16.mxu0 0
    %479 = vmatpush1.bf16.msra.mxu0 0
    %480 = vmatprep.subr.bf16.mxu0 0
    %481 = vmatpush1.bf16.msra.mxu0 0
    %482 = vmatprep.subr.bf16.mxu0 0
    %483 = vmatpush1.bf16.msra.mxu0 0
    %484 = vmatprep.subr.bf16.mxu0 0
    %485 = vmatpush1.bf16.msra.mxu0 0
    %486 = vmatprep.subr.bf16.mxu0 0
    %487 = vmatpush1.bf16.msra.mxu0 0
    %488 = vmatprep.subr.bf16.mxu0 0
    %489 = vmatpush1.bf16.msra.mxu0 0
    %490 = vmatprep.subr.bf16.mxu0 0
    %491 = vmatpush1.bf16.msra.mxu0 0
    %492 = vmatprep.subr.bf16.mxu0 0
    %493 = vmatpush1.bf16.msra.mxu0 0
    %494 = vmatprep.subr.bf16.mxu0 0
    %495 = vmatpush1.bf16.msra.mxu0 0
    %496 = vmatprep.subr.bf16.mxu0 0
    %497 = vmatpush1.bf16.msra.mxu0 0
    %498 = vmatprep.mubr.bf16.mxu0 0
    %499 = vmatmul.mubr.bf16.gmra.mrb[0].mxu0 %v460
    %v500 = vpop.f32.mrb[0].mxu0
    %v501 = vadd.f32 0.0, %v500
    %v502 = vpop.f32.mrb[0].mxu0
    %v503 = vpop.f32.mrb[0].mxu0
    %v504 = vpop.f32.mrb[0].mxu0
    %505 = vdwg.mxu0
    %506 = vrot.lane.b32.xlu0 %v209, 64
    %v507 = vpop.permute.xlu0 %506
    %v509 = vsel %vm215, %v454, 0
    %v512 = vsel %vm462, %v507, 0
    %514 = vmatprep.subr.bf16.mxu0 0
    %515 = vmatpush1.bf16.msra.mxu0 %v512
    %516 = vmatprep.subr.bf16.mxu0 0
    %517 = vmatpush1.bf16.msra.mxu0 0
    %518 = vmatprep.subr.bf16.mxu0 0
    %519 = vmatpush1.bf16.msra.mxu0 0
    %520 = vmatprep.subr.bf16.mxu0 0
    %521 = vmatpush1.bf16.msra.mxu0 0
    %522 = vmatprep.subr.bf16.mxu0 0
    %523 = vmatpush1.bf16.msra.mxu0 0
    %524 = vmatprep.subr.bf16.mxu0 0
    %525 = vmatpush1.bf16.msra.mxu0 0
    %526 = vmatprep.subr.bf16.mxu0 0
    %527 = vmatpush1.bf16.msra.mxu0 0
    %528 = vmatprep.subr.bf16.mxu0 0
    %529 = vmatpush1.bf16.msra.mxu0 0
    %530 = vmatprep.subr.bf16.mxu0 0
    %531 = vmatpush1.bf16.msra.mxu0 0
    %532 = vmatprep.subr.bf16.mxu0 0
    %533 = vmatpush1.bf16.msra.mxu0 0
    %534 = vmatprep.subr.bf16.mxu0 0
    %535 = vmatpush1.bf16.msra.mxu0 0
    %536 = vmatprep.subr.bf16.mxu0 0
    %537 = vmatpush1.bf16.msra.mxu0 0
    %538 = vmatprep.subr.bf16.mxu0 0
    %539 = vmatpush1.bf16.msra.mxu0 0
    %540 = vmatprep.subr.bf16.mxu0 0
    %541 = vmatpush1.bf16.msra.mxu0 0
    %542 = vmatprep.subr.bf16.mxu0 0
    %543 = vmatpush1.bf16.msra.mxu0 0
    %544 = vmatprep.subr.bf16.mxu0 0
    %545 = vmatpush1.bf16.msra.mxu0 0
    %546 = vmatprep.mubr.bf16.mxu0 0
    %547 = vmatmul.mubr.bf16.gmra.mrb[0].mxu0 %v509
    %v548 = vpop.f32.mrb[0].mxu0
    %v549 = vadd.f32 0.0, %v548
    %v550 = vpop.f32.mrb[0].mxu0
    %v551 = vpop.f32.mrb[0].mxu0
    %v552 = vpop.f32.mrb[0].mxu0
    %553 = vdwg.mxu0
    %554 = vrot.lane.b32.xlu0 %v210, 64
    %v555 = vpop.permute.xlu0 %554
    %v557 = vsel %vm215, %v455, 0
    %v560 = vsel %vm462, %v555, 0
    %562 = vmatprep.subr.bf16.mxu0 0
    %563 = vmatpush1.bf16.msra.mxu0 %v560
    %564 = vmatprep.subr.bf16.mxu0 0
    %565 = vmatpush1.bf16.msra.mxu0 0
    %566 = vmatprep.subr.bf16.mxu0 0
    %567 = vmatpush1.bf16.msra.mxu0 0
    %568 = vmatprep.subr.bf16.mxu0 0
    %569 = vmatpush1.bf16.msra.mxu0 0
    %570 = vmatprep.subr.bf16.mxu0 0
    %571 = vmatpush1.bf16.msra.mxu0 0
    %572 = vmatprep.subr.bf16.mxu0 0
    %573 = vmatpush1.bf16.msra.mxu0 0
    %574 = vmatprep.subr.bf16.mxu0 0
    %575 = vmatpush1.bf16.msra.mxu0 0
    %576 = vmatprep.subr.bf16.mxu0 0
    %577 = vmatpush1.bf16.msra.mxu0 0
    %578 = vmatprep.subr.bf16.mxu0 0
    %579 = vmatpush1.bf16.msra.mxu0 0
    %580 = vmatprep.subr.bf16.mxu0 0
    %581 = vmatpush1.bf16.msra.mxu0 0
    %582 = vmatprep.subr.bf16.mxu0 0
    %583 = vmatpush1.bf16.msra.mxu0 0
    %584 = vmatprep.subr.bf16.mxu0 0
    %585 = vmatpush1.bf16.msra.mxu0 0
    %586 = vmatprep.subr.bf16.mxu0 0
    %587 = vmatpush1.bf16.msra.mxu0 0
    %588 = vmatprep.subr.bf16.mxu0 0
    %589 = vmatpush1.bf16.msra.mxu0 0
    %590 = vmatprep.subr.bf16.mxu0 0
    %591 = vmatpush1.bf16.msra.mxu0 0
    %592 = vmatprep.subr.bf16.mxu0 0
    %593 = vmatpush1.bf16.msra.mxu0 0
    %594 = vmatprep.mubr.bf16.mxu0 0
    %595 = vmatmul.mubr.bf16.gmra.mrb[0].mxu0 %v557
    %v596 = vpop.f32.mrb[0].mxu0
    %v597 = vadd.f32 0.0, %v596
    %v598 = vpop.f32.mrb[0].mxu0
    %v599 = vpop.f32.mrb[0].mxu0
    %v600 = vpop.f32.mrb[0].mxu0
    %601 = vdwg.mxu0
    %602 = vrot.lane.b32.xlu0 %v211, 64
    %v603 = vpop.permute.xlu0 %602
    %v605 = vsel %vm215, %v456, 0
    %v608 = vsel %vm462, %v603, 0
    %610 = vmatprep.subr.bf16.mxu0 0
    %611 = vmatpush1.bf16.msra.mxu0 %v608
    %612 = vmatprep.subr.bf16.mxu0 0
    %613 = vmatpush1.bf16.msra.mxu0 0
    %614 = vmatprep.subr.bf16.mxu0 0
    %615 = vmatpush1.bf16.msra.mxu0 0
    %616 = vmatprep.subr.bf16.mxu0 0
    %617 = vmatpush1.bf16.msra.mxu0 0
    %618 = vmatprep.subr.bf16.mxu0 0
    %619 = vmatpush1.bf16.msra.mxu0 0
    %620 = vmatprep.subr.bf16.mxu0 0
    %621 = vmatpush1.bf16.msra.mxu0 0
    %622 = vmatprep.subr.bf16.mxu0 0
    %623 = vmatpush1.bf16.msra.mxu0 0
    %624 = vmatprep.subr.bf16.mxu0 0
    %625 = vmatpush1.bf16.msra.mxu0 0
    %626 = vmatprep.subr.bf16.mxu0 0
    %627 = vmatpush1.bf16.msra.mxu0 0
    %628 = vmatprep.subr.bf16.mxu0 0
    %629 = vmatpush1.bf16.msra.mxu0 0
    %630 = vmatprep.subr.bf16.mxu0 0
    %631 = vmatpush1.bf16.msra.mxu0 0
    %632 = vmatprep.subr.bf16.mxu0 0
    %633 = vmatpush1.bf16.msra.mxu0 0
    %634 = vmatprep.subr.bf16.mxu0 0
    %635 = vmatpush1.bf16.msra.mxu0 0
    %636 = vmatprep.subr.bf16.mxu0 0
    %637 = vmatpush1.bf16.msra.mxu0 0
    %638 = vmatprep.subr.bf16.mxu0 0
    %639 = vmatpush1.bf16.msra.mxu0 0
    %640 = vmatprep.subr.bf16.mxu0 0
    %641 = vmatpush1.bf16.msra.mxu0 0
    %642 = vmatprep.mubr.bf16.mxu0 0
    %643 = vmatmul.mubr.bf16.gmra.mrb[0].mxu0 %v605
    %v644 = vpop.f32.mrb[0].mxu0
    %v645 = vadd.f32 0.0, %v644
    %v646 = vpop.f32.mrb[0].mxu0
    %v647 = vpop.f32.mrb[0].mxu0
    %v648 = vpop.f32.mrb[0].mxu0
    %649 = vdwg.mxu0
    %650 = vrot.lane.b32.xlu0 %v208, 120
    %v651 = vpop.permute.xlu0 %650
    %652 = vrot.lane.b32.xlu0 %v208, 88
    %v653 = vpop.permute.xlu0 %652
    %v655 = vsel %vm215, %v651, 0
    %v658 = vsel %vm215, %v653, 0
    %660 = vmatprep.subr.bf16.mxu0 0
    %661 = vmatpush1.bf16.xpose.msra.mxu0 %v658
    %662 = vmatprep.subr.bf16.mxu0 0
    %663 = vmatpush1.bf16.xpose.msra.mxu0 0
    %664 = vmatprep.subr.bf16.mxu0 0
    %665 = vmatpush1.bf16.xpose.msra.mxu0 0
    %666 = vmatprep.subr.bf16.mxu0 0
    %667 = vmatpush1.bf16.xpose.msra.mxu0 0
    %668 = vmatprep.subr.bf16.mxu0 0
    %669 = vmatpush1.bf16.xpose.msra.mxu0 0
    %670 = vmatprep.subr.bf16.mxu0 0
    %671 = vmatpush1.bf16.xpose.msra.mxu0 0
    %672 = vmatprep.subr.bf16.mxu0 0
    %673 = vmatpush1.bf16.xpose.msra.mxu0 0
    %674 = vmatprep.subr.bf16.mxu0 0
    %675 = vmatpush1.bf16.xpose.msra.mxu0 0
    %676 = vmatprep.subr.bf16.mxu0 0
    %677 = vmatpush1.bf16.xpose.msra.mxu0 0
    %678 = vmatprep.subr.bf16.mxu0 0
    %679 = vmatpush1.bf16.xpose.msra.mxu0 0
    %680 = vmatprep.subr.bf16.mxu0 0
    %681 = vmatpush1.bf16.xpose.msra.mxu0 0
    %682 = vmatprep.subr.bf16.mxu0 0
    %683 = vmatpush1.bf16.xpose.msra.mxu0 0
    %684 = vmatprep.subr.bf16.mxu0 0
    %685 = vmatpush1.bf16.xpose.msra.mxu0 0
    %686 = vmatprep.subr.bf16.mxu0 0
    %687 = vmatpush1.bf16.xpose.msra.mxu0 0
    %688 = vmatprep.subr.bf16.mxu0 0
    %689 = vmatpush1.bf16.xpose.msra.mxu0 0
    %690 = vmatprep.subr.bf16.mxu0 0
    %691 = vmatpush1.bf16.xpose.msra.mxu0 0
    %692 = vmatprep.mubr.bf16.mxu0 0
    %693 = vmatmul.mubr.bf16.gmra.mrb[0].mxu0 %v655
    %v694 = vpop.f32.mrb[0].mxu0
    %v695 = vadd.f32 %v207, %v694
    %v696 = vpop.f32.mrb[0].mxu0
    %v697 = vpop.f32.mrb[0].mxu0
    %v698 = vpop.f32.mrb[0].mxu0
    %699 = vdwg.mxu0
    %700 = vrot.lane.b32.xlu0 %v209, 120
    %v701 = vpop.permute.xlu0 %700
    %702 = vrot.lane.b32.xlu0 %v209, 88
    %v703 = vpop.permute.xlu0 %702
    %v705 = vsel %vm215, %v701, 0
    %v708 = vsel %vm215, %v703, 0
    %710 = vmatprep.subr.bf16.mxu0 0
    %711 = vmatpush1.bf16.xpose.msra.mxu0 %v708
    %712 = vmatprep.subr.bf16.mxu0 0
    %713 = vmatpush1.bf16.xpose.msra.mxu0 0
    %714 = vmatprep.subr.bf16.mxu0 0
    %715 = vmatpush1.bf16.xpose.msra.mxu0 0
    %716 = vmatprep.subr.bf16.mxu0 0
    %717 = vmatpush1.bf16.xpose.msra.mxu0 0
    %718 = vmatprep.subr.bf16.mxu0 0
    %719 = vmatpush1.bf16.xpose.msra.mxu0 0
    %720 = vmatprep.subr.bf16.mxu0 0
    %721 = vmatpush1.bf16.xpose.msra.mxu0 0
    %722 = vmatprep.subr.bf16.mxu0 0
    %723 = vmatpush1.bf16.xpose.msra.mxu0 0
    %724 = vmatprep.subr.bf16.mxu0 0
    %725 = vmatpush1.bf16.xpose.msra.mxu0 0
    %726 = vmatprep.subr.bf16.mxu0 0
    %727 = vmatpush1.bf16.xpose.msra.mxu0 0
    %728 = vmatprep.subr.bf16.mxu0 0
    %729 = vmatpush1.bf16.xpose.msra.mxu0 0
    %730 = vmatprep.subr.bf16.mxu0 0
    %731 = vmatpush1.bf16.xpose.msra.mxu0 0
    %732 = vmatprep.subr.bf16.mxu0 0
    %733 = vmatpush1.bf16.xpose.msra.mxu0 0
    %734 = vmatprep.subr.bf16.mxu0 0
    %735 = vmatpush1.bf16.xpose.msra.mxu0 0
    %736 = vmatprep.subr.bf16.mxu0 0
    %737 = vmatpush1.bf16.xpose.msra.mxu0 0
    %738 = vmatprep.subr.bf16.mxu0 0
    %739 = vmatpush1.bf16.xpose.msra.mxu0 0
    %740 = vmatprep.subr.bf16.mxu0 0
    %741 = vmatpush1.bf16.xpose.msra.mxu0 0
    %742 = vmatprep.mubr.bf16.mxu0 0
    %743 = vmatmul.mubr.bf16.gmra.mrb[0].mxu0 %v705
    %v744 = vpop.f32.mrb[0].mxu0
    %v745 = vadd.f32 %v207, %v744
    %v746 = vpop.f32.mrb[0].mxu0
    %v747 = vpop.f32.mrb[0].mxu0
    %v748 = vpop.f32.mrb[0].mxu0
    %749 = vdwg.mxu0
    %750 = vrot.lane.b32.xlu0 %v210, 120
    %v751 = vpop.permute.xlu0 %750
    %752 = vrot.lane.b32.xlu0 %v210, 88
    %v753 = vpop.permute.xlu0 %752
    %v755 = vsel %vm215, %v751, 0
    %v758 = vsel %vm215, %v753, 0
    %760 = vmatprep.subr.bf16.mxu0 0
    %761 = vmatpush1.bf16.xpose.msra.mxu0 %v758
    %762 = vmatprep.subr.bf16.mxu0 0
    %763 = vmatpush1.bf16.xpose.msra.mxu0 0
    %764 = vmatprep.subr.bf16.mxu0 0
    %765 = vmatpush1.bf16.xpose.msra.mxu0 0
    %766 = vmatprep.subr.bf16.mxu0 0
    %767 = vmatpush1.bf16.xpose.msra.mxu0 0
    %768 = vmatprep.subr.bf16.mxu0 0
    %769 = vmatpush1.bf16.xpose.msra.mxu0 0
    %770 = vmatprep.subr.bf16.mxu0 0
    %771 = vmatpush1.bf16.xpose.msra.mxu0 0
    %772 = vmatprep.subr.bf16.mxu0 0
    %773 = vmatpush1.bf16.xpose.msra.mxu0 0
    %774 = vmatprep.subr.bf16.mxu0 0
    %775 = vmatpush1.bf16.xpose.msra.mxu0 0
    %776 = vmatprep.subr.bf16.mxu0 0
    %777 = vmatpush1.bf16.xpose.msra.mxu0 0
    %778 = vmatprep.subr.bf16.mxu0 0
    %779 = vmatpush1.bf16.xpose.msra.mxu0 0
    %780 = vmatprep.subr.bf16.mxu0 0
    %781 = vmatpush1.bf16.xpose.msra.mxu0 0
    %782 = vmatprep.subr.bf16.mxu0 0
    %783 = vmatpush1.bf16.xpose.msra.mxu0 0
    %784 = vmatprep.subr.bf16.mxu0 0
    %785 = vmatpush1.bf16.xpose.msra.mxu0 0
    %786 = vmatprep.subr.bf16.mxu0 0
    %787 = vmatpush1.bf16.xpose.msra.mxu0 0
    %788 = vmatprep.subr.bf16.mxu0 0
    %789 = vmatpush1.bf16.xpose.msra.mxu0 0
    %790 = vmatprep.subr.bf16.mxu0 0
    %791 = vmatpush1.bf16.xpose.msra.mxu0 0
    %792 = vmatprep.mubr.bf16.mxu0 0
    %793 = vmatmul.mubr.bf16.gmra.mrb[0].mxu0 %v755
    %v794 = vpop.f32.mrb[0].mxu0
    %v795 = vadd.f32 %v207, %v794
    %v796 = vpop.f32.mrb[0].mxu0
    %v797 = vpop.f32.mrb[0].mxu0
    %v798 = vpop.f32.mrb[0].mxu0
    %799 = vdwg.mxu0
    %800 = vrot.lane.b32.xlu0 %v211, 120
    %v801 = vpop.permute.xlu0 %800
    %802 = vrot.lane.b32.xlu0 %v211, 88
    %v803 = vpop.permute.xlu0 %802
    %v805 = vsel %vm215, %v801, 0
    %v808 = vsel %vm215, %v803, 0
    %810 = vmatprep.subr.bf16.mxu0 0
    %811 = vmatpush1.bf16.xpose.msra.mxu0 %v808
    %812 = vmatprep.subr.bf16.mxu0 0
    %813 = vmatpush1.bf16.xpose.msra.mxu0 0
    %814 = vmatprep.subr.bf16.mxu0 0
    %815 = vmatpush1.bf16.xpose.msra.mxu0 0
    %816 = vmatprep.subr.bf16.mxu0 0
    %817 = vmatpush1.bf16.xpose.msra.mxu0 0
    %818 = vmatprep.subr.bf16.mxu0 0
    %819 = vmatpush1.bf16.xpose.msra.mxu0 0
    %820 = vmatprep.subr.bf16.mxu0 0
    %821 = vmatpush1.bf16.xpose.msra.mxu0 0
    %822 = vmatprep.subr.bf16.mxu0 0
    %823 = vmatpush1.bf16.xpose.msra.mxu0 0
    %824 = vmatprep.subr.bf16.mxu0 0
    %825 = vmatpush1.bf16.xpose.msra.mxu0 0
    %826 = vmatprep.subr.bf16.mxu0 0
    %827 = vmatpush1.bf16.xpose.msra.mxu0 0
    %828 = vmatprep.subr.bf16.mxu0 0
    %829 = vmatpush1.bf16.xpose.msra.mxu0 0
    %830 = vmatprep.subr.bf16.mxu0 0
    %831 = vmatpush1.bf16.xpose.msra.mxu0 0
    %832 = vmatprep.subr.bf16.mxu0 0
    %833 = vmatpush1.bf16.xpose.msra.mxu0 0
    %834 = vmatprep.subr.bf16.mxu0 0
    %835 = vmatpush1.bf16.xpose.msra.mxu0 0
    %836 = vmatprep.subr.bf16.mxu0 0
    %837 = vmatpush1.bf16.xpose.msra.mxu0 0
    %838 = vmatprep.subr.bf16.mxu0 0
    %839 = vmatpush1.bf16.xpose.msra.mxu0 0
    %840 = vmatprep.subr.bf16.mxu0 0
    %841 = vmatpush1.bf16.xpose.msra.mxu0 0
    %842 = vmatprep.mubr.bf16.mxu0 0
    %843 = vmatmul.mubr.bf16.gmra.mrb[0].mxu0 %v805
    %v844 = vpop.f32.mrb[0].mxu0
    %v845 = vadd.f32 %v207, %v844
    %v846 = vpop.f32.mrb[0].mxu0
    %v847 = vpop.f32.mrb[0].mxu0
    %v848 = vpop.f32.mrb[0].mxu0
    %849 = vdwg.mxu0
    %v850 = vsel %vm215, %v695, -inf
    %851 = vmax.xlane.f32.xlu0 %v850
    %v852 = vpop.xlane.xlu0 %851
    %v853 = vsel %vm215, %v745, -inf
    %854 = vmax.xlane.f32.xlu0 %v853
    %v855 = vpop.xlane.xlu0 %854
    %v856 = vsel %vm215, %v795, -inf
    %857 = vmax.xlane.f32.xlu0 %v856
    %v858 = vpop.xlane.xlu0 %857
    %v859 = vsel %vm215, %v845, -inf
    %860 = vmax.xlane.f32.xlu0 %v859
    %v861 = vpop.xlane.xlu0 %860
    %v862 = vsub.f32 %v695, %v852
    %v863 = vsub.f32 %v745, %v855
    %v864 = vsub.f32 %v795, %v858
    %v865 = vsub.f32 %v845, %v861
    %v866 = vmul.f32 %v862, 1.442695
    %v867 = vpow.pop %v866
    %v868 = vmul.f32 %v863, 1.442695
    %v869 = vpow.pop %v868
    %v870 = vmul.f32 %v864, 1.442695
    %v871 = vpow.pop %v870
    %v872 = vmul.f32 %v865, 1.442695
    %v873 = vpow.pop %v872
    %v874 = vsel %vm215, %v867, 0.0
    %875 = vadd.xlane.f32.xlu0 %v874
    %v876 = vpop.xlane.xlu0 %875
    %v877 = vsel %vm215, %v869, 0.0
    %878 = vadd.xlane.f32.xlu0 %v877
    %v879 = vpop.xlane.xlu0 %878
    %v880 = vsel %vm215, %v871, 0.0
    %881 = vadd.xlane.f32.xlu0 %v880
    %v882 = vpop.xlane.xlu0 %881
    %v883 = vsel %vm215, %v873, 0.0
    %884 = vadd.xlane.f32.xlu0 %v883
    %v885 = vpop.xlane.xlu0 %884
    %v886 = vrcp.pop %v876
    %v887 = vrcp.pop %v879
    %v888 = vrcp.pop %v882
    %v889 = vrcp.pop %v885
    %v890 = vmul.f32 %v867, %v886
    %v891 = vmul.f32 %v869, %v887
    %v892 = vmul.f32 %v871, %v888
    %v893 = vmul.f32 %v873, %v889
    %v894 = vpack.c.bf16 %v890, %v890
    %v895 = vpack.c.bf16 %v891, %v891
    %v896 = vpack.c.bf16 %v892, %v892
    %v897 = vpack.c.bf16 %v893, %v893
    %898 = vrot.lane.b32.xlu0 %v208, 56
    %v899 = vpop.permute.xlu0 %898
    %v901 = vsel %vm215, %v894, 0
    %v904 = vsel %vm462, %v899, 0
    %906 = vmatprep.subr.bf16.mxu0 0
    %907 = vmatpush1.bf16.msra.mxu0 %v904
    %908 = vmatprep.subr.bf16.mxu0 0
    %909 = vmatpush1.bf16.msra.mxu0 0
    %910 = vmatprep.subr.bf16.mxu0 0
    %911 = vmatpush1.bf16.msra.mxu0 0
    %912 = vmatprep.subr.bf16.mxu0 0
    %913 = vmatpush1.bf16.msra.mxu0 0
    %914 = vmatprep.subr.bf16.mxu0 0
    %915 = vmatpush1.bf16.msra.mxu0 0
    %916 = vmatprep.subr.bf16.mxu0 0
    %917 = vmatpush1.bf16.msra.mxu0 0
    %918 = vmatprep.subr.bf16.mxu0 0
    %919 = vmatpush1.bf16.msra.mxu0 0
    %920 = vmatprep.subr.bf16.mxu0 0
    %921 = vmatpush1.bf16.msra.mxu0 0
    %922 = vmatprep.subr.bf16.mxu0 0
    %923 = vmatpush1.bf16.msra.mxu0 0
    %924 = vmatprep.subr.bf16.mxu0 0
    %925 = vmatpush1.bf16.msra.mxu0 0
    %926 = vmatprep.subr.bf16.mxu0 0
    %927 = vmatpush1.bf16.msra.mxu0 0
    %928 = vmatprep.subr.bf16.mxu0 0
    %929 = vmatpush1.bf16.msra.mxu0 0
    %930 = vmatprep.subr.bf16.mxu0 0
    %931 = vmatpush1.bf16.msra.mxu0 0
    %932 = vmatprep.subr.bf16.mxu0 0
    %933 = vmatpush1.bf16.msra.mxu0 0
    %934 = vmatprep.subr.bf16.mxu0 0
    %935 = vmatpush1.bf16.msra.mxu0 0
    %936 = vmatprep.subr.bf16.mxu0 0
    %937 = vmatpush1.bf16.msra.mxu0 0
    %938 = vmatprep.mubr.bf16.mxu0 0
    %939 = vmatmul.mubr.bf16.gmra.mrb[0].mxu0 %v901
    %v940 = vpop.f32.mrb[0].mxu0
    %v941 = vadd.f32 0.0, %v940
    %v942 = vpop.f32.mrb[0].mxu0
    %v943 = vpop.f32.mrb[0].mxu0
    %v944 = vpop.f32.mrb[0].mxu0
    %945 = vdwg.mxu0
    %946 = vrot.lane.b32.xlu0 %v209, 56
    %v947 = vpop.permute.xlu0 %946
    %v949 = vsel %vm215, %v895, 0
    %v952 = vsel %vm462, %v947, 0
    %954 = vmatprep.subr.bf16.mxu0 0
    %955 = vmatpush1.bf16.msra.mxu0 %v952
    %956 = vmatprep.subr.bf16.mxu0 0
    %957 = vmatpush1.bf16.msra.mxu0 0
    %958 = vmatprep.subr.bf16.mxu0 0
    %959 = vmatpush1.bf16.msra.mxu0 0
    %960 = vmatprep.subr.bf16.mxu0 0
    %961 = vmatpush1.bf16.msra.mxu0 0
    %962 = vmatprep.subr.bf16.mxu0 0
    %963 = vmatpush1.bf16.msra.mxu0 0
    %964 = vmatprep.subr.bf16.mxu0 0
    %965 = vmatpush1.bf16.msra.mxu0 0
    %966 = vmatprep.subr.bf16.mxu0 0
    %967 = vmatpush1.bf16.msra.mxu0 0
    %968 = vmatprep.subr.bf16.mxu0 0
    %969 = vmatpush1.bf16.msra.mxu0 0
    %970 = vmatprep.subr.bf16.mxu0 0
    %971 = vmatpush1.bf16.msra.mxu0 0
    %972 = vmatprep.subr.bf16.mxu0 0
    %973 = vmatpush1.bf16.msra.mxu0 0
    %974 = vmatprep.subr.bf16.mxu0 0
    %975 = vmatpush1.bf16.msra.mxu0 0
    %976 = vmatprep.subr.bf16.mxu0 0
    %977 = vmatpush1.bf16.msra.mxu0 0
    %978 = vmatprep.subr.bf16.mxu0 0
    %979 = vmatpush1.bf16.msra.mxu0 0
    %980 = vmatprep.subr.bf16.mxu0 0
    %981 = vmatpush1.bf16.msra.mxu0 0
    %982 = vmatprep.subr.bf16.mxu0 0
    %983 = vmatpush1.bf16.msra.mxu0 0
    %984 = vmatprep.subr.bf16.mxu0 0
    %985 = vmatpush1.bf16.msra.mxu0 0
    %986 = vmatprep.mubr.bf16.mxu0 0
    %987 = vmatmul.mubr.bf16.gmra.mrb[0].mxu0 %v949
    %v988 = vpop.f32.mrb[0].mxu0
    %v989 = vadd.f32 0.0, %v988
    %v990 = vpop.f32.mrb[0].mxu0
    %v991 = vpop.f32.mrb[0].mxu0
    %v992 = vpop.f32.mrb[0].mxu0
    %993 = vdwg.mxu0
    %994 = vrot.lane.b32.xlu0 %v210, 56
    %v995 = vpop.permute.xlu0 %994
    %v997 = vsel %vm215, %v896, 0
    %v1000 = vsel %vm462, %v995, 0
    %1002 = vmatprep.subr.bf16.mxu0 0
    %1003 = vmatpush1.bf16.msra.mxu0 %v1000
    %1004 = vmatprep.subr.bf16.mxu0 0
    %1005 = vmatpush1.bf16.msra.mxu0 0
    %1006 = vmatprep.subr.bf16.mxu0 0
    %1007 = vmatpush1.bf16.msra.mxu0 0
    %1008 = vmatprep.subr.bf16.mxu0 0
    %1009 = vmatpush1.bf16.msra.mxu0 0
    %1010 = vmatprep.subr.bf16.mxu0 0
    %1011 = vmatpush1.bf16.msra.mxu0 0
    %1012 = vmatprep.subr.bf16.mxu0 0
    %1013 = vmatpush1.bf16.msra.mxu0 0
    %1014 = vmatprep.subr.bf16.mxu0 0
    %1015 = vmatpush1.bf16.msra.mxu0 0
    %1016 = vmatprep.subr.bf16.mxu0 0
    %1017 = vmatpush1.bf16.msra.mxu0 0
    %1018 = vmatprep.subr.bf16.mxu0 0
    %1019 = vmatpush1.bf16.msra.mxu0 0
    %1020 = vmatprep.subr.bf16.mxu0 0
    %1021 = vmatpush1.bf16.msra.mxu0 0
    %1022 = vmatprep.subr.bf16.mxu0 0
    %1023 = vmatpush1.bf16.msra.mxu0 0
    %1024 = vmatprep.subr.bf16.mxu0 0
    %1025 = vmatpush1.bf16.msra.mxu0 0
    %1026 = vmatprep.subr.bf16.mxu0 0
    %1027 = vmatpush1.bf16.msra.mxu0 0
    %1028 = vmatprep.subr.bf16.mxu0 0
    %1029 = vmatpush1.bf16.msra.mxu0 0
    %1030 = vmatprep.subr.bf16.mxu0 0
    %1031 = vmatpush1.bf16.msra.mxu0 0
    %1032 = vmatprep.subr.bf16.mxu0 0
    %1033 = vmatpush1.bf16.msra.mxu0 0
    %1034 = vmatprep.mubr.bf16.mxu0 0
    %1035 = vmatmul.mubr.bf16.gmra.mrb[0].mxu0 %v997
    %v1036 = vpop.f32.mrb[0].mxu0
    %v1037 = vadd.f32 0.0, %v1036
    %v1038 = vpop.f32.mrb[0].mxu0
    %v1039 = vpop.f32.mrb[0].mxu0
    %v1040 = vpop.f32.mrb[0].mxu0
    %1041 = vdwg.mxu0
    %1042 = vrot.lane.b32.xlu0 %v211, 56
    %v1043 = vpop.permute.xlu0 %1042
    %v1045 = vsel %vm215, %v897, 0
    %v1048 = vsel %vm462, %v1043, 0
    %1050 = vmatprep.subr.bf16.mxu0 0
    %1051 = vmatpush1.bf16.msra.mxu0 %v1048
    %1052 = vmatprep.subr.bf16.mxu0 0
    %1053 = vmatpush1.bf16.msra.mxu0 0
    %1054 = vmatprep.subr.bf16.mxu0 0
    %1055 = vmatpush1.bf16.msra.mxu0 0
    %1056 = vmatprep.subr.bf16.mxu0 0
    %1057 = vmatpush1.bf16.msra.mxu0 0
    %1058 = vmatprep.subr.bf16.mxu0 0
    %1059 = vmatpush1.bf16.msra.mxu0 0
    %1060 = vmatprep.subr.bf16.mxu0 0
    %1061 = vmatpush1.bf16.msra.mxu0 0
    %1062 = vmatprep.subr.bf16.mxu0 0
    %1063 = vmatpush1.bf16.msra.mxu0 0
    %1064 = vmatprep.subr.bf16.mxu0 0
    %1065 = vmatpush1.bf16.msra.mxu0 0
    %1066 = vmatprep.subr.bf16.mxu0 0
    %1067 = vmatpush1.bf16.msra.mxu0 0
    %1068 = vmatprep.subr.bf16.mxu0 0
    %1069 = vmatpush1.bf16.msra.mxu0 0
    %1070 = vmatprep.subr.bf16.mxu0 0
    %1071 = vmatpush1.bf16.msra.mxu0 0
    %1072 = vmatprep.subr.bf16.mxu0 0
    %1073 = vmatpush1.bf16.msra.mxu0 0
    %1074 = vmatprep.subr.bf16.mxu0 0
    %1075 = vmatpush1.bf16.msra.mxu0 0
    %1076 = vmatprep.subr.bf16.mxu0 0
    %1077 = vmatpush1.bf16.msra.mxu0 0
    %1078 = vmatprep.subr.bf16.mxu0 0
    %1079 = vmatpush1.bf16.msra.mxu0 0
    %1080 = vmatprep.subr.bf16.mxu0 0
    %1081 = vmatpush1.bf16.msra.mxu0 0
    %1082 = vmatprep.mubr.bf16.mxu0 0
    %1083 = vmatmul.mubr.bf16.gmra.mrb[0].mxu0 %v1045
    %v1084 = vpop.f32.mrb[0].mxu0
    %v1085 = vadd.f32 0.0, %v1084
    %v1086 = vpop.f32.mrb[0].mxu0
    %v1087 = vpop.f32.mrb[0].mxu0
    %v1088 = vpop.f32.mrb[0].mxu0
    %1089 = vdwg.mxu0
    %1090 = vrot.lane.b32.xlu0 %v208, 112
    %v1091 = vpop.permute.xlu0 %1090
    %1092 = vrot.lane.b32.xlu0 %v208, 80
    %v1093 = vpop.permute.xlu0 %1092
    %v1095 = vsel %vm215, %v1091, 0
    %v1098 = vsel %vm215, %v1093, 0
    %1100 = vmatprep.subr.bf16.mxu0 0
    %1101 = vmatpush1.bf16.xpose.msra.mxu0 %v1098
    %1102 = vmatprep.subr.bf16.mxu0 0
    %1103 = vmatpush1.bf16.xpose.msra.mxu0 0
    %1104 = vmatprep.subr.bf16.mxu0 0
    %1105 = vmatpush1.bf16.xpose.msra.mxu0 0
    %1106 = vmatprep.subr.bf16.mxu0 0
    %1107 = vmatpush1.bf16.xpose.msra.mxu0 0
    %1108 = vmatprep.subr.bf16.mxu0 0
    %1109 = vmatpush1.bf16.xpose.msra.mxu0 0
    %1110 = vmatprep.subr.bf16.mxu0 0
    %1111 = vmatpush1.bf16.xpose.msra.mxu0 0
    %1112 = vmatprep.subr.bf16.mxu0 0
    %1113 = vmatpush1.bf16.xpose.msra.mxu0 0
    %1114 = vmatprep.subr.bf16.mxu0 0
    %1115 = vmatpush1.bf16.xpose.msra.mxu0 0
    %1116 = vmatprep.subr.bf16.mxu0 0
    %1117 = vmatpush1.bf16.xpose.msra.mxu0 0
    %1118 = vmatprep.subr.bf16.mxu0 0
    %1119 = vmatpush1.bf16.xpose.msra.mxu0 0
    %1120 = vmatprep.subr.bf16.mxu0 0
    %1121 = vmatpush1.bf16.xpose.msra.mxu0 0
    %1122 = vmatprep.subr.bf16.mxu0 0
    %1123 = vmatpush1.bf16.xpose.msra.mxu0 0
    %1124 = vmatprep.subr.bf16.mxu0 0
    %1125 = vmatpush1.bf16.xpose.msra.mxu0 0
    %1126 = vmatprep.subr.bf16.mxu0 0
    %1127 = vmatpush1.bf16.xpose.msra.mxu0 0
    %1128 = vmatprep.subr.bf16.mxu0 0
    %1129 = vmatpush1.bf16.xpose.msra.mxu0 0
    %1130 = vmatprep.subr.bf16.mxu0 0
    %1131 = vmatpush1.bf16.xpose.msra.mxu0 0
    %1132 = vmatprep.mubr.bf16.mxu0 0
    %1133 = vmatmul.mubr.bf16.gmra.mrb[0].mxu0 %v1095
    %v1134 = vpop.f32.mrb[0].mxu0
    %v1135 = vadd.f32 %v207, %v1134
    %v1136 = vpop.f32.mrb[0].mxu0
    %v1137 = vpop.f32.mrb[0].mxu0
    %v1138 = vpop.f32.mrb[0].mxu0
    %1139 = vdwg.mxu0
    %1140 = vrot.lane.b32.xlu0 %v209, 112
    %v1141 = vpop.permute.xlu0 %1140
    %1142 = vrot.lane.b32.xlu0 %v209, 80
    %v1143 = vpop.permute.xlu0 %1142
    %v1145 = vsel %vm215, %v1141, 0
    %v1148 = vsel %vm215, %v1143, 0
    %1150 = vmatprep.subr.bf16.mxu0 0
    %1151 = vmatpush1.bf16.xpose.msra.mxu0 %v1148
    %1152 = vmatprep.subr.bf16.mxu0 0
    %1153 = vmatpush1.bf16.xpose.msra.mxu0 0
    %1154 = vmatprep.subr.bf16.mxu0 0
    %1155 = vmatpush1.bf16.xpose.msra.mxu0 0
    %1156 = vmatprep.subr.bf16.mxu0 0
    %1157 = vmatpush1.bf16.xpose.msra.mxu0 0
    %1158 = vmatprep.subr.bf16.mxu0 0
    %1159 = vmatpush1.bf16.xpose.msra.mxu0 0
    %1160 = vmatprep.subr.bf16.mxu0 0
    %1161 = vmatpush1.bf16.xpose.msra.mxu0 0
    %1162 = vmatprep.subr.bf16.mxu0 0
    %1163 = vmatpush1.bf16.xpose.msra.mxu0 0
    %1164 = vmatprep.subr.bf16.mxu0 0
    %1165 = vmatpush1.bf16.xpose.msra.mxu0 0
    %1166 = vmatprep.subr.bf16.mxu0 0
    %1167 = vmatpush1.bf16.xpose.msra.mxu0 0
    %1168 = vmatprep.subr.bf16.mxu0 0
    %1169 = vmatpush1.bf16.xpose.msra.mxu0 0
    %1170 = vmatprep.subr.bf16.mxu0 0
    %1171 = vmatpush1.bf16.xpose.msra.mxu0 0
    %1172 = vmatprep.subr.bf16.mxu0 0
    %1173 = vmatpush1.bf16.xpose.msra.mxu0 0
    %1174 = vmatprep.subr.bf16.mxu0 0
    %1175 = vmatpush1.bf16.xpose.msra.mxu0 0
    %1176 = vmatprep.subr.bf16.mxu0 0
    %1177 = vmatpush1.bf16.xpose.msra.mxu0 0
    %1178 = vmatprep.subr.bf16.mxu0 0
    %1179 = vmatpush1.bf16.xpose.msra.mxu0 0
    %1180 = vmatprep.subr.bf16.mxu0 0
    %1181 = vmatpush1.bf16.xpose.msra.mxu0 0
    %1182 = vmatprep.mubr.bf16.mxu0 0
    %1183 = vmatmul.mubr.bf16.gmra.mrb[0].mxu0 %v1145
    %v1184 = vpop.f32.mrb[0].mxu0
    %v1185 = vadd.f32 %v207, %v1184
    %v1186 = vpop.f32.mrb[0].mxu0
    %v1187 = vpop.f32.mrb[0].mxu0
    %v1188 = vpop.f32.mrb[0].mxu0
    %1189 = vdwg.mxu0
    %1190 = vrot.lane.b32.xlu0 %v210, 112
    %v1191 = vpop.permute.xlu0 %1190
    %1192 = vrot.lane.b32.xlu0 %v210, 80
    %v1193 = vpop.permute.xlu0 %1192
    %v1195 = vsel %vm215, %v1191, 0
    %v1198 = vsel %vm215, %v1193, 0
    %1200 = vmatprep.subr.bf16.mxu0 0
    %1201 = vmatpush1.bf16.xpose.msra.mxu0 %v1198
    %1202 = vmatprep.subr.bf16.mxu0 0
    %1203 = vmatpush1.bf16.xpose.msra.mxu0 0
    %1204 = vmatprep.subr.bf16.mxu0 0
    %1205 = vmatpush1.bf16.xpose.msra.mxu0 0
    %1206 = vmatprep.subr.bf16.mxu0 0
    %1207 = vmatpush1.bf16.xpose.msra.mxu0 0
    %1208 = vmatprep.subr.bf16.mxu0 0
    %1209 = vmatpush1.bf16.xpose.msra.mxu0 0
    %1210 = vmatprep.subr.bf16.mxu0 0
    %1211 = vmatpush1.bf16.xpose.msra.mxu0 0
    %1212 = vmatprep.subr.bf16.mxu0 0
    %1213 = vmatpush1.bf16.xpose.msra.mxu0 0
    %1214 = vmatprep.subr.bf16.mxu0 0
    %1215 = vmatpush1.bf16.xpose.msra.mxu0 0
    %1216 = vmatprep.subr.bf16.mxu0 0
    %1217 = vmatpush1.bf16.xpose.msra.mxu0 0
    %1218 = vmatprep.subr.bf16.mxu0 0
    %1219 = vmatpush1.bf16.xpose.msra.mxu0 0
    %1220 = vmatprep.subr.bf16.mxu0 0
    %1221 = vmatpush1.bf16.xpose.msra.mxu0 0
    %1222 = vmatprep.subr.bf16.mxu0 0
    %1223 = vmatpush1.bf16.xpose.msra.mxu0 0
    %1224 = vmatprep.subr.bf16.mxu0 0
    %1225 = vmatpush1.bf16.xpose.msra.mxu0 0
    %1226 = vmatprep.subr.bf16.mxu0 0
    %1227 = vmatpush1.bf16.xpose.msra.mxu0 0
    %1228 = vmatprep.subr.bf16.mxu0 0
    %1229 = vmatpush1.bf16.xpose.msra.mxu0 0
    %1230 = vmatprep.subr.bf16.mxu0 0
    %1231 = vmatpush1.bf16.xpose.msra.mxu0 0
    %1232 = vmatprep.mubr.bf16.mxu0 0
    %1233 = vmatmul.mubr.bf16.gmra.mrb[0].mxu0 %v1195
    %v1234 = vpop.f32.mrb[0].mxu0
    %v1235 = vadd.f32 %v207, %v1234
    %v1236 = vpop.f32.mrb[0].mxu0
    %v1237 = vpop.f32.mrb[0].mxu0
    %v1238 = vpop.f32.mrb[0].mxu0
    %1239 = vdwg.mxu0
    %1240 = vrot.lane.b32.xlu0 %v211, 112
    %v1241 = vpop.permute.xlu0 %1240
    %1242 = vrot.lane.b32.xlu0 %v211, 80
    %v1243 = vpop.permute.xlu0 %1242
    %v1245 = vsel %vm215, %v1241, 0
    %v1248 = vsel %vm215, %v1243, 0
    %1250 = vmatprep.subr.bf16.mxu0 0
    %1251 = vmatpush1.bf16.xpose.msra.mxu0 %v1248
    %1252 = vmatprep.subr.bf16.mxu0 0
    %1253 = vmatpush1.bf16.xpose.msra.mxu0 0
    %1254 = vmatprep.subr.bf16.mxu0 0
    %1255 = vmatpush1.bf16.xpose.msra.mxu0 0
    %1256 = vmatprep.subr.bf16.mxu0 0
    %1257 = vmatpush1.bf16.xpose.msra.mxu0 0
    %1258 = vmatprep.subr.bf16.mxu0 0
    %1259 = vmatpush1.bf16.xpose.msra.mxu0 0
    %1260 = vmatprep.subr.bf16.mxu0 0
    %1261 = vmatpush1.bf16.xpose.msra.mxu0 0
    %1262 = vmatprep.subr.bf16.mxu0 0
    %1263 = vmatpush1.bf16.xpose.msra.mxu0 0
    %1264 = vmatprep.subr.bf16.mxu0 0
    %1265 = vmatpush1.bf16.xpose.msra.mxu0 0
    %1266 = vmatprep.subr.bf16.mxu0 0
    %1267 = vmatpush1.bf16.xpose.msra.mxu0 0
    %1268 = vmatprep.subr.bf16.mxu0 0
    %1269 = vmatpush1.bf16.xpose.msra.mxu0 0
    %1270 = vmatprep.subr.bf16.mxu0 0
    %1271 = vmatpush1.bf16.xpose.msra.mxu0 0
    %1272 = vmatprep.subr.bf16.mxu0 0
    %1273 = vmatpush1.bf16.xpose.msra.mxu0 0
    %1274 = vmatprep.subr.bf16.mxu0 0
    %1275 = vmatpush1.bf16.xpose.msra.mxu0 0
    %1276 = vmatprep.subr.bf16.mxu0 0
    %1277 = vmatpush1.bf16.xpose.msra.mxu0 0
    %1278 = vmatprep.subr.bf16.mxu0 0
    %1279 = vmatpush1.bf16.xpose.msra.mxu0 0
    %1280 = vmatprep.subr.bf16.mxu0 0
    %1281 = vmatpush1.bf16.xpose.msra.mxu0 0
    %1282 = vmatprep.mubr.bf16.mxu0 0
    %1283 = vmatmul.mubr.bf16.gmra.mrb[0].mxu0 %v1245
    %v1284 = vpop.f32.mrb[0].mxu0
    %v1285 = vadd.f32 %v207, %v1284
    %v1286 = vpop.f32.mrb[0].mxu0
    %v1287 = vpop.f32.mrb[0].mxu0
    %v1288 = vpop.f32.mrb[0].mxu0
    %1289 = vdwg.mxu0
    %v1290 = vsel %vm215, %v1135, -inf
    %1291 = vmax.xlane.f32.xlu0 %v1290
    %v1292 = vpop.xlane.xlu0 %1291
    %v1293 = vsel %vm215, %v1185, -inf
    %1294 = vmax.xlane.f32.xlu0 %v1293
    %v1295 = vpop.xlane.xlu0 %1294
    %v1296 = vsel %vm215, %v1235, -inf
    %1297 = vmax.xlane.f32.xlu0 %v1296
    %v1298 = vpop.xlane.xlu0 %1297
    %v1299 = vsel %vm215, %v1285, -inf
    %1300 = vmax.xlane.f32.xlu0 %v1299
    %v1301 = vpop.xlane.xlu0 %1300
    %v1302 = vsub.f32 %v1135, %v1292
    %v1303 = vsub.f32 %v1185, %v1295
    %v1304 = vsub.f32 %v1235, %v1298
    %v1305 = vsub.f32 %v1285, %v1301
    %v1306 = vmul.f32 %v1302, 1.442695
    %v1307 = vpow.pop %v1306
    %v1308 = vmul.f32 %v1303, 1.442695
    %v1309 = vpow.pop %v1308
    %v1310 = vmul.f32 %v1304, 1.442695
    %v1311 = vpow.pop %v1310
    %v1312 = vmul.f32 %v1305, 1.442695
    %v1313 = vpow.pop %v1312
    %v1314 = vsel %vm215, %v1307, 0.0
    %1315 = vadd.xlane.f32.xlu0 %v1314
    %v1316 = vpop.xlane.xlu0 %1315
    %v1317 = vsel %vm215, %v1309, 0.0
    %1318 = vadd.xlane.f32.xlu0 %v1317
    %v1319 = vpop.xlane.xlu0 %1318
    %v1320 = vsel %vm215, %v1311, 0.0
    %1321 = vadd.xlane.f32.xlu0 %v1320
    %v1322 = vpop.xlane.xlu0 %1321
    %v1323 = vsel %vm215, %v1313, 0.0
    %1324 = vadd.xlane.f32.xlu0 %v1323
    %v1325 = vpop.xlane.xlu0 %1324
    %v1326 = vrcp.pop %v1316
    %v1327 = vrcp.pop %v1319
    %v1328 = vrcp.pop %v1322
    %v1329 = vrcp.pop %v1325
    %v1330 = vmul.f32 %v1307, %v1326
    %v1331 = vmul.f32 %v1309, %v1327
    %v1332 = vmul.f32 %v1311, %v1328
    %v1333 = vmul.f32 %v1313, %v1329
    %v1334 = vpack.c.bf16 %v1330, %v1330
    %v1335 = vpack.c.bf16 %v1331, %v1331
    %v1336 = vpack.c.bf16 %v1332, %v1332
    %v1337 = vpack.c.bf16 %v1333, %v1333
    %1338 = vrot.lane.b32.xlu0 %v208, 48
    %v1339 = vpop.permute.xlu0 %1338
    %v1341 = vsel %vm215, %v1334, 0
    %v1344 = vsel %vm462, %v1339, 0
    %1346 = vmatprep.subr.bf16.mxu0 0
    %1347 = vmatpush1.bf16.msra.mxu0 %v1344
    %1348 = vmatprep.subr.bf16.mxu0 0
    %1349 = vmatpush1.bf16.msra.mxu0 0
    %1350 = vmatprep.subr.bf16.mxu0 0
    %1351 = vmatpush1.bf16.msra.mxu0 0
    %1352 = vmatprep.subr.bf16.mxu0 0
    %1353 = vmatpush1.bf16.msra.mxu0 0
    %1354 = vmatprep.subr.bf16.mxu0 0
    %1355 = vmatpush1.bf16.msra.mxu0 0
    %1356 = vmatprep.subr.bf16.mxu0 0
    %1357 = vmatpush1.bf16.msra.mxu0 0
    %1358 = vmatprep.subr.bf16.mxu0 0
    %1359 = vmatpush1.bf16.msra.mxu0 0
    %1360 = vmatprep.subr.bf16.mxu0 0
    %1361 = vmatpush1.bf16.msra.mxu0 0
    %1362 = vmatprep.subr.bf16.mxu0 0
    %1363 = vmatpush1.bf16.msra.mxu0 0
    %1364 = vmatprep.subr.bf16.mxu0 0
    %1365 = vmatpush1.bf16.msra.mxu0 0
    %1366 = vmatprep.subr.bf16.mxu0 0
    %1367 = vmatpush1.bf16.msra.mxu0 0
    %1368 = vmatprep.subr.bf16.mxu0 0
    %1369 = vmatpush1.bf16.msra.mxu0 0
    %1370 = vmatprep.subr.bf16.mxu0 0
    %1371 = vmatpush1.bf16.msra.mxu0 0
    %1372 = vmatprep.subr.bf16.mxu0 0
    %1373 = vmatpush1.bf16.msra.mxu0 0
    %1374 = vmatprep.subr.bf16.mxu0 0
    %1375 = vmatpush1.bf16.msra.mxu0 0
    %1376 = vmatprep.subr.bf16.mxu0 0
    %1377 = vmatpush1.bf16.msra.mxu0 0
    %1378 = vmatprep.mubr.bf16.mxu0 0
    %1379 = vmatmul.mubr.bf16.gmra.mrb[0].mxu0 %v1341
    %v1380 = vpop.f32.mrb[0].mxu0
    %v1381 = vadd.f32 0.0, %v1380
    %v1382 = vpop.f32.mrb[0].mxu0
    %v1383 = vpop.f32.mrb[0].mxu0
    %v1384 = vpop.f32.mrb[0].mxu0
    %1385 = vdwg.mxu0
    %1386 = vrot.lane.b32.xlu0 %v209, 48
    %v1387 = vpop.permute.xlu0 %1386
    %v1389 = vsel %vm215, %v1335, 0
    %v1392 = vsel %vm462, %v1387, 0
    %1394 = vmatprep.subr.bf16.mxu0 0
    %1395 = vmatpush1.bf16.msra.mxu0 %v1392
    %1396 = vmatprep.subr.bf16.mxu0 0
    %1397 = vmatpush1.bf16.msra.mxu0 0
    %1398 = vmatprep.subr.bf16.mxu0 0
    %1399 = vmatpush1.bf16.msra.mxu0 0
    %1400 = vmatprep.subr.bf16.mxu0 0
    %1401 = vmatpush1.bf16.msra.mxu0 0
    %1402 = vmatprep.subr.bf16.mxu0 0
    %1403 = vmatpush1.bf16.msra.mxu0 0
    %1404 = vmatprep.subr.bf16.mxu0 0
    %1405 = vmatpush1.bf16.msra.mxu0 0
    %1406 = vmatprep.subr.bf16.mxu0 0
    %1407 = vmatpush1.bf16.msra.mxu0 0
    %1408 = vmatprep.subr.bf16.mxu0 0
    %1409 = vmatpush1.bf16.msra.mxu0 0
    %1410 = vmatprep.subr.bf16.mxu0 0
    %1411 = vmatpush1.bf16.msra.mxu0 0
    %1412 = vmatprep.subr.bf16.mxu0 0
    %1413 = vmatpush1.bf16.msra.mxu0 0
    %1414 = vmatprep.subr.bf16.mxu0 0
    %1415 = vmatpush1.bf16.msra.mxu0 0
    %1416 = vmatprep.subr.bf16.mxu0 0
    %1417 = vmatpush1.bf16.msra.mxu0 0
    %1418 = vmatprep.subr.bf16.mxu0 0
    %1419 = vmatpush1.bf16.msra.mxu0 0
    %1420 = vmatprep.subr.bf16.mxu0 0
    %1421 = vmatpush1.bf16.msra.mxu0 0
    %1422 = vmatprep.subr.bf16.mxu0 0
    %1423 = vmatpush1.bf16.msra.mxu0 0
    %1424 = vmatprep.subr.bf16.mxu0 0
    %1425 = vmatpush1.bf16.msra.mxu0 0
    %1426 = vmatprep.mubr.bf16.mxu0 0
    %1427 = vmatmul.mubr.bf16.gmra.mrb[0].mxu0 %v1389
    %v1428 = vpop.f32.mrb[0].mxu0
    %v1429 = vadd.f32 0.0, %v1428
    %v1430 = vpop.f32.mrb[0].mxu0
    %v1431 = vpop.f32.mrb[0].mxu0
    %v1432 = vpop.f32.mrb[0].mxu0
    %1433 = vdwg.mxu0
    %1434 = vrot.lane.b32.xlu0 %v210, 48
    %v1435 = vpop.permute.xlu0 %1434
    %v1437 = vsel %vm215, %v1336, 0
    %v1440 = vsel %vm462, %v1435, 0
    %1442 = vmatprep.subr.bf16.mxu0 0
    %1443 = vmatpush1.bf16.msra.mxu0 %v1440
    %1444 = vmatprep.subr.bf16.mxu0 0
    %1445 = vmatpush1.bf16.msra.mxu0 0
    %1446 = vmatprep.subr.bf16.mxu0 0
    %1447 = vmatpush1.bf16.msra.mxu0 0
    %1448 = vmatprep.subr.bf16.mxu0 0
    %1449 = vmatpush1.bf16.msra.mxu0 0
    %1450 = vmatprep.subr.bf16.mxu0 0
    %1451 = vmatpush1.bf16.msra.mxu0 0
    %1452 = vmatprep.subr.bf16.mxu0 0
    %1453 = vmatpush1.bf16.msra.mxu0 0
    %1454 = vmatprep.subr.bf16.mxu0 0
    %1455 = vmatpush1.bf16.msra.mxu0 0
    %1456 = vmatprep.subr.bf16.mxu0 0
    %1457 = vmatpush1.bf16.msra.mxu0 0
    %1458 = vmatprep.subr.bf16.mxu0 0
    %1459 = vmatpush1.bf16.msra.mxu0 0
    %1460 = vmatprep.subr.bf16.mxu0 0
    %1461 = vmatpush1.bf16.msra.mxu0 0
    %1462 = vmatprep.subr.bf16.mxu0 0
    %1463 = vmatpush1.bf16.msra.mxu0 0
    %1464 = vmatprep.subr.bf16.mxu0 0
    %1465 = vmatpush1.bf16.msra.mxu0 0
    %1466 = vmatprep.subr.bf16.mxu0 0
    %1467 = vmatpush1.bf16.msra.mxu0 0
    %1468 = vmatprep.subr.bf16.mxu0 0
    %1469 = vmatpush1.bf16.msra.mxu0 0
    %1470 = vmatprep.subr.bf16.mxu0 0
    %1471 = vmatpush1.bf16.msra.mxu0 0
    %1472 = vmatprep.subr.bf16.mxu0 0
    %1473 = vmatpush1.bf16.msra.mxu0 0
    %1474 = vmatprep.mubr.bf16.mxu0 0
    %1475 = vmatmul.mubr.bf16.gmra.mrb[0].mxu0 %v1437
    %v1476 = vpop.f32.mrb[0].mxu0
    %v1477 = vadd.f32 0.0, %v1476
    %v1478 = vpop.f32.mrb[0].mxu0
    %v1479 = vpop.f32.mrb[0].mxu0
    %v1480 = vpop.f32.mrb[0].mxu0
    %1481 = vdwg.mxu0
    %1482 = vrot.lane.b32.xlu0 %v211, 48
    %v1483 = vpop.permute.xlu0 %1482
    %v1485 = vsel %vm215, %v1337, 0
    %v1488 = vsel %vm462, %v1483, 0
    %1490 = vmatprep.subr.bf16.mxu0 0
    %1491 = vmatpush1.bf16.msra.mxu0 %v1488
    %1492 = vmatprep.subr.bf16.mxu0 0
    %1493 = vmatpush1.bf16.msra.mxu0 0
    %1494 = vmatprep.subr.bf16.mxu0 0
    %1495 = vmatpush1.bf16.msra.mxu0 0
    %1496 = vmatprep.subr.bf16.mxu0 0
    %1497 = vmatpush1.bf16.msra.mxu0 0
    %1498 = vmatprep.subr.bf16.mxu0 0
    %1499 = vmatpush1.bf16.msra.mxu0 0
    %1500 = vmatprep.subr.bf16.mxu0 0
    %1501 = vmatpush1.bf16.msra.mxu0 0
    %1502 = vmatprep.subr.bf16.mxu0 0
    %1503 = vmatpush1.bf16.msra.mxu0 0
    %1504 = vmatprep.subr.bf16.mxu0 0
    %1505 = vmatpush1.bf16.msra.mxu0 0
    %1506 = vmatprep.subr.bf16.mxu0 0
    %1507 = vmatpush1.bf16.msra.mxu0 0
    %1508 = vmatprep.subr.bf16.mxu0 0
    %1509 = vmatpush1.bf16.msra.mxu0 0
    %1510 = vmatprep.subr.bf16.mxu0 0
    %1511 = vmatpush1.bf16.msra.mxu0 0
    %1512 = vmatprep.subr.bf16.mxu0 0
    %1513 = vmatpush1.bf16.msra.mxu0 0
    %1514 = vmatprep.subr.bf16.mxu0 0
    %1515 = vmatpush1.bf16.msra.mxu0 0
    %1516 = vmatprep.subr.bf16.mxu0 0
    %1517 = vmatpush1.bf16.msra.mxu0 0
    %1518 = vmatprep.subr.bf16.mxu0 0
    %1519 = vmatpush1.bf16.msra.mxu0 0
    %1520 = vmatprep.subr.bf16.mxu0 0
    %1521 = vmatpush1.bf16.msra.mxu0 0
    %1522 = vmatprep.mubr.bf16.mxu0 0
    %1523 = vmatmul.mubr.bf16.gmra.mrb[0].mxu0 %v1485
    %v1524 = vpop.f32.mrb[0].mxu0
    %v1525 = vadd.f32 0.0, %v1524
    %v1526 = vpop.f32.mrb[0].mxu0
    %v1527 = vpop.f32.mrb[0].mxu0
    %v1528 = vpop.f32.mrb[0].mxu0
    %1529 = vdwg.mxu0
    %1530 = vrot.lane.b32.xlu0 %v208, 104
    %v1531 = vpop.permute.xlu0 %1530
    %1532 = vrot.lane.b32.xlu0 %v208, 72
    %v1533 = vpop.permute.xlu0 %1532
    %v1535 = vsel %vm215, %v1531, 0
    %v1538 = vsel %vm215, %v1533, 0
    %1540 = vmatprep.subr.bf16.mxu0 0
    %1541 = vmatpush1.bf16.xpose.msra.mxu0 %v1538
    %1542 = vmatprep.subr.bf16.mxu0 0
    %1543 = vmatpush1.bf16.xpose.msra.mxu0 0
    %1544 = vmatprep.subr.bf16.mxu0 0
    %1545 = vmatpush1.bf16.xpose.msra.mxu0 0
    %1546 = vmatprep.subr.bf16.mxu0 0
    %1547 = vmatpush1.bf16.xpose.msra.mxu0 0
    %1548 = vmatprep.subr.bf16.mxu0 0
    %1549 = vmatpush1.bf16.xpose.msra.mxu0 0
    %1550 = vmatprep.subr.bf16.mxu0 0
    %1551 = vmatpush1.bf16.xpose.msra.mxu0 0
    %1552 = vmatprep.subr.bf16.mxu0 0
    %1553 = vmatpush1.bf16.xpose.msra.mxu0 0
    %1554 = vmatprep.subr.bf16.mxu0 0
    %1555 = vmatpush1.bf16.xpose.msra.mxu0 0
    %1556 = vmatprep.subr.bf16.mxu0 0
    %1557 = vmatpush1.bf16.xpose.msra.mxu0 0
    %1558 = vmatprep.subr.bf16.mxu0 0
    %1559 = vmatpush1.bf16.xpose.msra.mxu0 0
    %1560 = vmatprep.subr.bf16.mxu0 0
    %1561 = vmatpush1.bf16.xpose.msra.mxu0 0
    %1562 = vmatprep.subr.bf16.mxu0 0
    %1563 = vmatpush1.bf16.xpose.msra.mxu0 0
    %1564 = vmatprep.subr.bf16.mxu0 0
    %1565 = vmatpush1.bf16.xpose.msra.mxu0 0
    %1566 = vmatprep.subr.bf16.mxu0 0
    %1567 = vmatpush1.bf16.xpose.msra.mxu0 0
    %1568 = vmatprep.subr.bf16.mxu0 0
    %1569 = vmatpush1.bf16.xpose.msra.mxu0 0
    %1570 = vmatprep.subr.bf16.mxu0 0
    %1571 = vmatpush1.bf16.xpose.msra.mxu0 0
    %1572 = vmatprep.mubr.bf16.mxu0 0
    %1573 = vmatmul.mubr.bf16.gmra.mrb[0].mxu0 %v1535
    %v1574 = vpop.f32.mrb[0].mxu0
    %v1575 = vadd.f32 %v207, %v1574
    %v1576 = vpop.f32.mrb[0].mxu0
    %v1577 = vpop.f32.mrb[0].mxu0
    %v1578 = vpop.f32.mrb[0].mxu0
    %1579 = vdwg.mxu0
    %1580 = vrot.lane.b32.xlu0 %v209, 104
    %v1581 = vpop.permute.xlu0 %1580
    %1582 = vrot.lane.b32.xlu0 %v209, 72
    %v1583 = vpop.permute.xlu0 %1582
    %v1585 = vsel %vm215, %v1581, 0
    %v1588 = vsel %vm215, %v1583, 0
    %1590 = vmatprep.subr.bf16.mxu0 0
    %1591 = vmatpush1.bf16.xpose.msra.mxu0 %v1588
    %1592 = vmatprep.subr.bf16.mxu0 0
    %1593 = vmatpush1.bf16.xpose.msra.mxu0 0
    %1594 = vmatprep.subr.bf16.mxu0 0
    %1595 = vmatpush1.bf16.xpose.msra.mxu0 0
    %1596 = vmatprep.subr.bf16.mxu0 0
    %1597 = vmatpush1.bf16.xpose.msra.mxu0 0
    %1598 = vmatprep.subr.bf16.mxu0 0
    %1599 = vmatpush1.bf16.xpose.msra.mxu0 0
    %1600 = vmatprep.subr.bf16.mxu0 0
    %1601 = vmatpush1.bf16.xpose.msra.mxu0 0
    %1602 = vmatprep.subr.bf16.mxu0 0
    %1603 = vmatpush1.bf16.xpose.msra.mxu0 0
    %1604 = vmatprep.subr.bf16.mxu0 0
    %1605 = vmatpush1.bf16.xpose.msra.mxu0 0
    %1606 = vmatprep.subr.bf16.mxu0 0
    %1607 = vmatpush1.bf16.xpose.msra.mxu0 0
    %1608 = vmatprep.subr.bf16.mxu0 0
    %1609 = vmatpush1.bf16.xpose.msra.mxu0 0
    %1610 = vmatprep.subr.bf16.mxu0 0
    %1611 = vmatpush1.bf16.xpose.msra.mxu0 0
    %1612 = vmatprep.subr.bf16.mxu0 0
    %1613 = vmatpush1.bf16.xpose.msra.mxu0 0
    %1614 = vmatprep.subr.bf16.mxu0 0
    %1615 = vmatpush1.bf16.xpose.msra.mxu0 0
    %1616 = vmatprep.subr.bf16.mxu0 0
    %1617 = vmatpush1.bf16.xpose.msra.mxu0 0
    %1618 = vmatprep.subr.bf16.mxu0 0
    %1619 = vmatpush1.bf16.xpose.msra.mxu0 0
    %1620 = vmatprep.subr.bf16.mxu0 0
    %1621 = vmatpush1.bf16.xpose.msra.mxu0 0
    %1622 = vmatprep.mubr.bf16.mxu0 0
    %1623 = vmatmul.mubr.bf16.gmra.mrb[0].mxu0 %v1585
    %v1624 = vpop.f32.mrb[0].mxu0
    %v1625 = vadd.f32 %v207, %v1624
    %v1626 = vpop.f32.mrb[0].mxu0
    %v1627 = vpop.f32.mrb[0].mxu0
    %v1628 = vpop.f32.mrb[0].mxu0
    %1629 = vdwg.mxu0
    %1630 = vrot.lane.b32.xlu0 %v210, 104
    %v1631 = vpop.permute.xlu0 %1630
    %1632 = vrot.lane.b32.xlu0 %v210, 72
    %v1633 = vpop.permute.xlu0 %1632
    %v1635 = vsel %vm215, %v1631, 0
    %v1638 = vsel %vm215, %v1633, 0
    %1640 = vmatprep.subr.bf16.mxu0 0
    %1641 = vmatpush1.bf16.xpose.msra.mxu0 %v1638
    %1642 = vmatprep.subr.bf16.mxu0 0
    %1643 = vmatpush1.bf16.xpose.msra.mxu0 0
    %1644 = vmatprep.subr.bf16.mxu0 0
    %1645 = vmatpush1.bf16.xpose.msra.mxu0 0
    %1646 = vmatprep.subr.bf16.mxu0 0
    %1647 = vmatpush1.bf16.xpose.msra.mxu0 0
    %1648 = vmatprep.subr.bf16.mxu0 0
    %1649 = vmatpush1.bf16.xpose.msra.mxu0 0
    %1650 = vmatprep.subr.bf16.mxu0 0
    %1651 = vmatpush1.bf16.xpose.msra.mxu0 0
    %1652 = vmatprep.subr.bf16.mxu0 0
    %1653 = vmatpush1.bf16.xpose.msra.mxu0 0
    %1654 = vmatprep.subr.bf16.mxu0 0
    %1655 = vmatpush1.bf16.xpose.msra.mxu0 0
    %1656 = vmatprep.subr.bf16.mxu0 0
    %1657 = vmatpush1.bf16.xpose.msra.mxu0 0
    %1658 = vmatprep.subr.bf16.mxu0 0
    %1659 = vmatpush1.bf16.xpose.msra.mxu0 0
    %1660 = vmatprep.subr.bf16.mxu0 0
    %1661 = vmatpush1.bf16.xpose.msra.mxu0 0
    %1662 = vmatprep.subr.bf16.mxu0 0
    %1663 = vmatpush1.bf16.xpose.msra.mxu0 0
    %1664 = vmatprep.subr.bf16.mxu0 0
    %1665 = vmatpush1.bf16.xpose.msra.mxu0 0
    %1666 = vmatprep.subr.bf16.mxu0 0
    %1667 = vmatpush1.bf16.xpose.msra.mxu0 0
    %1668 = vmatprep.subr.bf16.mxu0 0
    %1669 = vmatpush1.bf16.xpose.msra.mxu0 0
    %1670 = vmatprep.subr.bf16.mxu0 0
    %1671 = vmatpush1.bf16.xpose.msra.mxu0 0
    %1672 = vmatprep.mubr.bf16.mxu0 0
    %1673 = vmatmul.mubr.bf16.gmra.mrb[0].mxu0 %v1635
    %v1674 = vpop.f32.mrb[0].mxu0
    %v1675 = vadd.f32 %v207, %v1674
    %v1676 = vpop.f32.mrb[0].mxu0
    %v1677 = vpop.f32.mrb[0].mxu0
    %v1678 = vpop.f32.mrb[0].mxu0
    %1679 = vdwg.mxu0
    %1680 = vrot.lane.b32.xlu0 %v211, 104
    %v1681 = vpop.permute.xlu0 %1680
    %1682 = vrot.lane.b32.xlu0 %v211, 72
    %v1683 = vpop.permute.xlu0 %1682
    %v1685 = vsel %vm215, %v1681, 0
    %v1688 = vsel %vm215, %v1683, 0
    %1690 = vmatprep.subr.bf16.mxu0 0
    %1691 = vmatpush1.bf16.xpose.msra.mxu0 %v1688
    %1692 = vmatprep.subr.bf16.mxu0 0
    %1693 = vmatpush1.bf16.xpose.msra.mxu0 0
    %1694 = vmatprep.subr.bf16.mxu0 0
    %1695 = vmatpush1.bf16.xpose.msra.mxu0 0
    %1696 = vmatprep.subr.bf16.mxu0 0
    %1697 = vmatpush1.bf16.xpose.msra.mxu0 0
    %1698 = vmatprep.subr.bf16.mxu0 0
    %1699 = vmatpush1.bf16.xpose.msra.mxu0 0
    %1700 = vmatprep.subr.bf16.mxu0 0
    %1701 = vmatpush1.bf16.xpose.msra.mxu0 0
    %1702 = vmatprep.subr.bf16.mxu0 0
    %1703 = vmatpush1.bf16.xpose.msra.mxu0 0
    %1704 = vmatprep.subr.bf16.mxu0 0
    %1705 = vmatpush1.bf16.xpose.msra.mxu0 0
    %1706 = vmatprep.subr.bf16.mxu0 0
    %1707 = vmatpush1.bf16.xpose.msra.mxu0 0
    %1708 = vmatprep.subr.bf16.mxu0 0
    %1709 = vmatpush1.bf16.xpose.msra.mxu0 0
    %1710 = vmatprep.subr.bf16.mxu0 0
    %1711 = vmatpush1.bf16.xpose.msra.mxu0 0
    %1712 = vmatprep.subr.bf16.mxu0 0
    %1713 = vmatpush1.bf16.xpose.msra.mxu0 0
    %1714 = vmatprep.subr.bf16.mxu0 0
    %1715 = vmatpush1.bf16.xpose.msra.mxu0 0
    %1716 = vmatprep.subr.bf16.mxu0 0
    %1717 = vmatpush1.bf16.xpose.msra.mxu0 0
    %1718 = vmatprep.subr.bf16.mxu0 0
    %1719 = vmatpush1.bf16.xpose.msra.mxu0 0
    %1720 = vmatprep.subr.bf16.mxu0 0
    %1721 = vmatpush1.bf16.xpose.msra.mxu0 0
    %1722 = vmatprep.mubr.bf16.mxu0 0
    %1723 = vmatmul.mubr.bf16.gmra.mrb[0].mxu0 %v1685
    %v1724 = vpop.f32.mrb[0].mxu0
    %v1725 = vadd.f32 %v207, %v1724
    %v1726 = vpop.f32.mrb[0].mxu0
    %v1727 = vpop.f32.mrb[0].mxu0
    %v1728 = vpop.f32.mrb[0].mxu0
    %1729 = vdwg.mxu0
    %v1730 = vsel %vm215, %v1575, -inf
    %1731 = vmax.xlane.f32.xlu0 %v1730
    %v1732 = vpop.xlane.xlu0 %1731
    %v1733 = vsel %vm215, %v1625, -inf
    %1734 = vmax.xlane.f32.xlu0 %v1733
    %v1735 = vpop.xlane.xlu0 %1734
    %v1736 = vsel %vm215, %v1675, -inf
    %1737 = vmax.xlane.f32.xlu0 %v1736
    %v1738 = vpop.xlane.xlu0 %1737
    %v1739 = vsel %vm215, %v1725, -inf
    %1740 = vmax.xlane.f32.xlu0 %v1739
    %v1741 = vpop.xlane.xlu0 %1740
    %v1742 = vsub.f32 %v1575, %v1732
    %v1743 = vsub.f32 %v1625, %v1735
    %v1744 = vsub.f32 %v1675, %v1738
    %v1745 = vsub.f32 %v1725, %v1741
    %v1746 = vmul.f32 %v1742, 1.442695
    %v1747 = vpow.pop %v1746
    %v1748 = vmul.f32 %v1743, 1.442695
    %v1749 = vpow.pop %v1748
    %v1750 = vmul.f32 %v1744, 1.442695
    %v1751 = vpow.pop %v1750
    %v1752 = vmul.f32 %v1745, 1.442695
    %v1753 = vpow.pop %v1752
    %v1754 = vsel %vm215, %v1747, 0.0
    %1755 = vadd.xlane.f32.xlu0 %v1754
    %v1756 = vpop.xlane.xlu0 %1755
    %v1757 = vsel %vm215, %v1749, 0.0
    %1758 = vadd.xlane.f32.xlu0 %v1757
    %v1759 = vpop.xlane.xlu0 %1758
    %v1760 = vsel %vm215, %v1751, 0.0
    %1761 = vadd.xlane.f32.xlu0 %v1760
    %v1762 = vpop.xlane.xlu0 %1761
    %v1763 = vsel %vm215, %v1753, 0.0
    %1764 = vadd.xlane.f32.xlu0 %v1763
    %v1765 = vpop.xlane.xlu0 %1764
    %v1766 = vrcp.pop %v1756
    %v1767 = vrcp.pop %v1759
    %v1768 = vrcp.pop %v1762
    %v1769 = vrcp.pop %v1765
    %v1770 = vmul.f32 %v1747, %v1766
    %v1771 = vmul.f32 %v1749, %v1767
    %v1772 = vmul.f32 %v1751, %v1768
    %v1773 = vmul.f32 %v1753, %v1769
    %v1774 = vpack.c.bf16 %v1770, %v1770
    %v1775 = vpack.c.bf16 %v1771, %v1771
    %v1776 = vpack.c.bf16 %v1772, %v1772
    %v1777 = vpack.c.bf16 %v1773, %v1773
    %1778 = vrot.lane.b32.xlu0 %v208, 40
    %v1779 = vpop.permute.xlu0 %1778
    %v1781 = vsel %vm215, %v1774, 0
    %v1784 = vsel %vm462, %v1779, 0
    %1786 = vmatprep.subr.bf16.mxu0 0
    %1787 = vmatpush1.bf16.msra.mxu0 %v1784
    %1788 = vmatprep.subr.bf16.mxu0 0
    %1789 = vmatpush1.bf16.msra.mxu0 0
    %1790 = vmatprep.subr.bf16.mxu0 0
    %1791 = vmatpush1.bf16.msra.mxu0 0
    %1792 = vmatprep.subr.bf16.mxu0 0
    %1793 = vmatpush1.bf16.msra.mxu0 0
    %1794 = vmatprep.subr.bf16.mxu0 0
    %1795 = vmatpush1.bf16.msra.mxu0 0
    %1796 = vmatprep.subr.bf16.mxu0 0
    %1797 = vmatpush1.bf16.msra.mxu0 0
    %1798 = vmatprep.subr.bf16.mxu0 0
    %1799 = vmatpush1.bf16.msra.mxu0 0
    %1800 = vmatprep.subr.bf16.mxu0 0
    %1801 = vmatpush1.bf16.msra.mxu0 0
    %1802 = vmatprep.subr.bf16.mxu0 0
    %1803 = vmatpush1.bf16.msra.mxu0 0
    %1804 = vmatprep.subr.bf16.mxu0 0
    %1805 = vmatpush1.bf16.msra.mxu0 0
    %1806 = vmatprep.subr.bf16.mxu0 0
    %1807 = vmatpush1.bf16.msra.mxu0 0
    %1808 = vmatprep.subr.bf16.mxu0 0
    %1809 = vmatpush1.bf16.msra.mxu0 0
    %1810 = vmatprep.subr.bf16.mxu0 0
    %1811 = vmatpush1.bf16.msra.mxu0 0
    %1812 = vmatprep.subr.bf16.mxu0 0
    %1813 = vmatpush1.bf16.msra.mxu0 0
    %1814 = vmatprep.subr.bf16.mxu0 0
    %1815 = vmatpush1.bf16.msra.mxu0 0
    %1816 = vmatprep.subr.bf16.mxu0 0
    %1817 = vmatpush1.bf16.msra.mxu0 0
    %1818 = vmatprep.mubr.bf16.mxu0 0
    %1819 = vmatmul.mubr.bf16.gmra.mrb[0].mxu0 %v1781
    %v1820 = vpop.f32.mrb[0].mxu0
    %v1821 = vadd.f32 0.0, %v1820
    %v1822 = vpop.f32.mrb[0].mxu0
    %v1823 = vpop.f32.mrb[0].mxu0
    %v1824 = vpop.f32.mrb[0].mxu0
    %1825 = vdwg.mxu0
    %1826 = vrot.lane.b32.xlu0 %v209, 40
    %v1827 = vpop.permute.xlu0 %1826
    %v1829 = vsel %vm215, %v1775, 0
    %v1832 = vsel %vm462, %v1827, 0
    %1834 = vmatprep.subr.bf16.mxu0 0
    %1835 = vmatpush1.bf16.msra.mxu0 %v1832
    %1836 = vmatprep.subr.bf16.mxu0 0
    %1837 = vmatpush1.bf16.msra.mxu0 0
    %1838 = vmatprep.subr.bf16.mxu0 0
    %1839 = vmatpush1.bf16.msra.mxu0 0
    %1840 = vmatprep.subr.bf16.mxu0 0
    %1841 = vmatpush1.bf16.msra.mxu0 0
    %1842 = vmatprep.subr.bf16.mxu0 0
    %1843 = vmatpush1.bf16.msra.mxu0 0
    %1844 = vmatprep.subr.bf16.mxu0 0
    %1845 = vmatpush1.bf16.msra.mxu0 0
    %1846 = vmatprep.subr.bf16.mxu0 0
    %1847 = vmatpush1.bf16.msra.mxu0 0
    %1848 = vmatprep.subr.bf16.mxu0 0
    %1849 = vmatpush1.bf16.msra.mxu0 0
    %1850 = vmatprep.subr.bf16.mxu0 0
    %1851 = vmatpush1.bf16.msra.mxu0 0
    %1852 = vmatprep.subr.bf16.mxu0 0
    %1853 = vmatpush1.bf16.msra.mxu0 0
    %1854 = vmatprep.subr.bf16.mxu0 0
    %1855 = vmatpush1.bf16.msra.mxu0 0
    %1856 = vmatprep.subr.bf16.mxu0 0
    %1857 = vmatpush1.bf16.msra.mxu0 0
    %1858 = vmatprep.subr.bf16.mxu0 0
    %1859 = vmatpush1.bf16.msra.mxu0 0
    %1860 = vmatprep.subr.bf16.mxu0 0
    %1861 = vmatpush1.bf16.msra.mxu0 0
    %1862 = vmatprep.subr.bf16.mxu0 0
    %1863 = vmatpush1.bf16.msra.mxu0 0
    %1864 = vmatprep.subr.bf16.mxu0 0
    %1865 = vmatpush1.bf16.msra.mxu0 0
    %1866 = vmatprep.mubr.bf16.mxu0 0
    %1867 = vmatmul.mubr.bf16.gmra.mrb[0].mxu0 %v1829
    %v1868 = vpop.f32.mrb[0].mxu0
    %v1869 = vadd.f32 0.0, %v1868
    %v1870 = vpop.f32.mrb[0].mxu0
    %v1871 = vpop.f32.mrb[0].mxu0
    %v1872 = vpop.f32.mrb[0].mxu0
    %1873 = vdwg.mxu0
    %1874 = vrot.lane.b32.xlu0 %v210, 40
    %v1875 = vpop.permute.xlu0 %1874
    %v1877 = vsel %vm215, %v1776, 0
    %v1880 = vsel %vm462, %v1875, 0
    %1882 = vmatprep.subr.bf16.mxu0 0
    %1883 = vmatpush1.bf16.msra.mxu0 %v1880
    %1884 = vmatprep.subr.bf16.mxu0 0
    %1885 = vmatpush1.bf16.msra.mxu0 0
    %1886 = vmatprep.subr.bf16.mxu0 0
    %1887 = vmatpush1.bf16.msra.mxu0 0
    %1888 = vmatprep.subr.bf16.mxu0 0
    %1889 = vmatpush1.bf16.msra.mxu0 0
    %1890 = vmatprep.subr.bf16.mxu0 0
    %1891 = vmatpush1.bf16.msra.mxu0 0
    %1892 = vmatprep.subr.bf16.mxu0 0
    %1893 = vmatpush1.bf16.msra.mxu0 0
    %1894 = vmatprep.subr.bf16.mxu0 0
    %1895 = vmatpush1.bf16.msra.mxu0 0
    %1896 = vmatprep.subr.bf16.mxu0 0
    %1897 = vmatpush1.bf16.msra.mxu0 0
    %1898 = vmatprep.subr.bf16.mxu0 0
    %1899 = vmatpush1.bf16.msra.mxu0 0
    %1900 = vmatprep.subr.bf16.mxu0 0
    %1901 = vmatpush1.bf16.msra.mxu0 0
    %1902 = vmatprep.subr.bf16.mxu0 0
    %1903 = vmatpush1.bf16.msra.mxu0 0
    %1904 = vmatprep.subr.bf16.mxu0 0
    %1905 = vmatpush1.bf16.msra.mxu0 0
    %1906 = vmatprep.subr.bf16.mxu0 0
    %1907 = vmatpush1.bf16.msra.mxu0 0
    %1908 = vmatprep.subr.bf16.mxu0 0
    %1909 = vmatpush1.bf16.msra.mxu0 0
    %1910 = vmatprep.subr.bf16.mxu0 0
    %1911 = vmatpush1.bf16.msra.mxu0 0
    %1912 = vmatprep.subr.bf16.mxu0 0
    %1913 = vmatpush1.bf16.msra.mxu0 0
    %1914 = vmatprep.mubr.bf16.mxu0 0
    %1915 = vmatmul.mubr.bf16.gmra.mrb[0].mxu0 %v1877
    %v1916 = vpop.f32.mrb[0].mxu0
    %v1917 = vadd.f32 0.0, %v1916
    %v1918 = vpop.f32.mrb[0].mxu0
    %v1919 = vpop.f32.mrb[0].mxu0
    %v1920 = vpop.f32.mrb[0].mxu0
    %1921 = vdwg.mxu0
    %1922 = vrot.lane.b32.xlu0 %v211, 40
    %v1923 = vpop.permute.xlu0 %1922
    %v1925 = vsel %vm215, %v1777, 0
    %v1928 = vsel %vm462, %v1923, 0
    %1930 = vmatprep.subr.bf16.mxu0 0
    %1931 = vmatpush1.bf16.msra.mxu0 %v1928
    %1932 = vmatprep.subr.bf16.mxu0 0
    %1933 = vmatpush1.bf16.msra.mxu0 0
    %1934 = vmatprep.subr.bf16.mxu0 0
    %1935 = vmatpush1.bf16.msra.mxu0 0
    %1936 = vmatprep.subr.bf16.mxu0 0
    %1937 = vmatpush1.bf16.msra.mxu0 0
    %1938 = vmatprep.subr.bf16.mxu0 0
    %1939 = vmatpush1.bf16.msra.mxu0 0
    %1940 = vmatprep.subr.bf16.mxu0 0
    %1941 = vmatpush1.bf16.msra.mxu0 0
    %1942 = vmatprep.subr.bf16.mxu0 0
    %1943 = vmatpush1.bf16.msra.mxu0 0
    %1944 = vmatprep.subr.bf16.mxu0 0
    %1945 = vmatpush1.bf16.msra.mxu0 0
    %1946 = vmatprep.subr.bf16.mxu0 0
    %1947 = vmatpush1.bf16.msra.mxu0 0
    %1948 = vmatprep.subr.bf16.mxu0 0
    %1949 = vmatpush1.bf16.msra.mxu0 0
    %1950 = vmatprep.subr.bf16.mxu0 0
    %1951 = vmatpush1.bf16.msra.mxu0 0
    %1952 = vmatprep.subr.bf16.mxu0 0
    %1953 = vmatpush1.bf16.msra.mxu0 0
    %1954 = vmatprep.subr.bf16.mxu0 0
    %1955 = vmatpush1.bf16.msra.mxu0 0
    %1956 = vmatprep.subr.bf16.mxu0 0
    %1957 = vmatpush1.bf16.msra.mxu0 0
    %1958 = vmatprep.subr.bf16.mxu0 0
    %1959 = vmatpush1.bf16.msra.mxu0 0
    %1960 = vmatprep.subr.bf16.mxu0 0
    %1961 = vmatpush1.bf16.msra.mxu0 0
    %1962 = vmatprep.mubr.bf16.mxu0 0
    %1963 = vmatmul.mubr.bf16.gmra.mrb[0].mxu0 %v1925
    %v1964 = vpop.f32.mrb[0].mxu0
    %v1965 = vadd.f32 0.0, %v1964
    %v1966 = vpop.f32.mrb[0].mxu0
    %v1967 = vpop.f32.mrb[0].mxu0
    %v1968 = vpop.f32.mrb[0].mxu0
    %1969 = vdwg.mxu0
    %1974 = vrot.lane.b32.xlu0 %v941, 8
    %v1975 = vpop.permute.xlu0 %1974
    %1976 = vrot.lane.b32.xlu0 %v989, 8
    %v1977 = vpop.permute.xlu0 %1976
    %1978 = vrot.lane.b32.xlu0 %v1037, 8
    %v1979 = vpop.permute.xlu0 %1978
    %1980 = vrot.lane.b32.xlu0 %v1085, 8
    %v1981 = vpop.permute.xlu0 %1980
    %1990 = vrot.lane.b32.xlu0 %v1381, 16
    %v1991 = vpop.permute.xlu0 %1990
    %1992 = vrot.lane.b32.xlu0 %v1429, 16
    %v1993 = vpop.permute.xlu0 %1992
    %1994 = vrot.lane.b32.xlu0 %v1477, 16
    %v1995 = vpop.permute.xlu0 %1994
    %1996 = vrot.lane.b32.xlu0 %v1525, 16
    %v1997 = vpop.permute.xlu0 %1996
    %2006 = vrot.lane.b32.xlu0 %v1821, 24
    %v2007 = vpop.permute.xlu0 %2006
    %2008 = vrot.lane.b32.xlu0 %v1869, 24
    %v2009 = vpop.permute.xlu0 %2008
    %2010 = vrot.lane.b32.xlu0 %v1917, 24
    %v2011 = vpop.permute.xlu0 %2010
    %2012 = vrot.lane.b32.xlu0 %v1965, 24
    %v2013 = vpop.permute.xlu0 %2012
    %v2018 = vsel %vm215, %v501, %v1975
    %v2019 = vsel %vm215, %v549, %v1977
    %v2020 = vsel %vm215, %v597, %v1979
    %v2021 = vsel %vm215, %v645, %v1981
    %vm2022 = vcmask 130048
    %v2023 = vsel %vm2022, %v2018, %v1991
    %v2024 = vsel %vm2022, %v2019, %v1993
    %v2025 = vsel %vm2022, %v2020, %v1995
    %v2026 = vsel %vm2022, %v2021, %v1997
    %vm2027 = vcmask 195584
    %v2028 = vsel %vm2027, %v2023, %v2007
    %v2029 = vsel %vm2027, %v2024, %v2009
    %v2030 = vsel %vm2027, %v2025, %v2011
    %v2031 = vsel %vm2027, %v2026, %v2013
    %v2032 = vpack.c.bf16 %v2029, %v2028
    %v2033 = vpack.c.bf16 %v2031, %v2030
    %v2034 = vld [vmem:[%s5] sm:$0xf]
    %v2035 = vld [vmem:[%s5 + $0x4] sm:$0xf]
    %v2036 = vld [vmem:[%s5 + $0x8] sm:$0xf]
    %v2037 = vld [vmem:[%s5 + $0xc] sm:$0xf]
    %v2038 = vld [vmem:[%s6] sm:$0x1]
    %v2040 = vlaneseq
    %v2041 = vshrl.u32 %v2040, 7
    %v2042 = vsub.s32 0, %v2041
    %v2043 = vrot.slane %v2038, %v2042
    %v2049 = vunpack.c.l.b16 %v2034
    %v2050 = vunpack.c.l.b16 %v2035
    %v2051 = vunpack.c.l.b16 %v2036
    %v2052 = vunpack.c.l.b16 %v2037
    %v2053 = vpack.c.b16 %v2050, %v2049
    %v2054 = vpack.c.b16 %v2052, %v2051
    %v2058 = vsel %vm57, %v2032, 0
    %v2061 = vsel %vm57, %v2033, 0
    %2063 = vmatprep.subr.bf16.mxu0 0
    %2064 = vmatpush1.bf16.msra.mxu0 %v2053
    %2065 = vmatprep.subr.bf16.mxu0 0
    %2066 = vmatpush1.bf16.msra.mxu0 %v2054
    %2067 = vmatprep.subr.bf16.mxu0 0
    %2068 = vmatpush1.bf16.msra.mxu0 0
    %2069 = vmatprep.subr.bf16.mxu0 0
    %2070 = vmatpush1.bf16.msra.mxu0 0
    %2071 = vmatprep.subr.bf16.mxu0 0
    %2072 = vmatpush1.bf16.msra.mxu0 0
    %2073 = vmatprep.subr.bf16.mxu0 0
    %2074 = vmatpush1.bf16.msra.mxu0 0
    %2075 = vmatprep.subr.bf16.mxu0 0
    %2076 = vmatpush1.bf16.msra.mxu0 0
    %2077 = vmatprep.subr.bf16.mxu0 0
    %2078 = vmatpush1.bf16.msra.mxu0 0
    %2079 = vmatprep.subr.bf16.mxu0 0
    %2080 = vmatpush1.bf16.msra.mxu0 0
    %2081 = vmatprep.subr.bf16.mxu0 0
    %2082 = vmatpush1.bf16.msra.mxu0 0
    %2083 = vmatprep.subr.bf16.mxu0 0
    %2084 = vmatpush1.bf16.msra.mxu0 0
    %2085 = vmatprep.subr.bf16.mxu0 0
    %2086 = vmatpush1.bf16.msra.mxu0 0
    %2087 = vmatprep.subr.bf16.mxu0 0
    %2088 = vmatpush1.bf16.msra.mxu0 0
    %2089 = vmatprep.subr.bf16.mxu0 0
    %2090 = vmatpush1.bf16.msra.mxu0 0
    %2091 = vmatprep.subr.bf16.mxu0 0
    %2092 = vmatpush1.bf16.msra.mxu0 0
    %2093 = vmatprep.subr.bf16.mxu0 0
    %2094 = vmatpush1.bf16.msra.mxu0 0
    %2095 = vmatprep.mubr.bf16.mxu0 0
    %2096 = vmatmul.mubr.bf16.gmra.mrb[0].mxu0 %v2058
    %v2097 = vpop.f32.mrb[0].mxu0
    %v2098 = vadd.f32 %v2043, %v2097
    %v2099 = vpop.f32.mrb[0].mxu0
    %v2100 = vpop.f32.mrb[0].mxu0
    %v2101 = vadd.f32 %v2043, %v2100
    %v2102 = vpop.f32.mrb[0].mxu0
    %2103 = vmatprep.mubr.bf16.mxu0 0
    %2104 = vmatmul.mubr.bf16.gmra.mrb[0].mxu0 %v2061
    %v2105 = vpop.f32.mrb[0].mxu0
    %v2106 = vadd.f32 %v2043, %v2105
    %v2107 = vpop.f32.mrb[0].mxu0
    %v2108 = vpop.f32.mrb[0].mxu0
    %v2109 = vadd.f32 %v2043, %v2108
    %v2110 = vpop.f32.mrb[0].mxu0
    %2111 = vdwg.mxu0
    %v2112 = vadd.f32 %v52, %v2098
    %v2113 = vadd.f32 %v53, %v2101
    %v2114 = vadd.f32 %v54, %v2106
    %v2115 = vadd.f32 %v55, %v2109
    %v2116 = vsel %vm57, %v2112, 0.0
    %2117 = vadd.xlane.f32.xlu0 %v2116
    %v2118 = vpop.xlane.xlu0 %2117
    %v2119 = vsel %vm57, %v2113, 0.0
    %2120 = vadd.xlane.f32.xlu0 %v2119
    %v2121 = vpop.xlane.xlu0 %2120
    %v2122 = vsel %vm57, %v2114, 0.0
    %2123 = vadd.xlane.f32.xlu0 %v2122
    %v2124 = vpop.xlane.xlu0 %2123
    %v2125 = vsel %vm57, %v2115, 0.0
    %2126 = vadd.xlane.f32.xlu0 %v2125
    %v2127 = vpop.xlane.xlu0 %2126
    %v2128 = vmul.f32 %v2118, %v70
    %v2129 = vmul.f32 %v2121, %v70
    %v2130 = vmul.f32 %v2124, %v70
    %v2131 = vmul.f32 %v2127, %v70
    %v2132 = vsub.f32 %v2112, %v2128
    %v2133 = vsub.f32 %v2113, %v2129
    %v2134 = vsub.f32 %v2114, %v2130
    %v2135 = vsub.f32 %v2115, %v2131
    %v2136 = vmul.f32 %v2132, %v2132
    %v2137 = vmul.f32 %v2133, %v2133
    %v2138 = vmul.f32 %v2134, %v2134
    %v2139 = vmul.f32 %v2135, %v2135
    %v2140 = vsel %vm57, %v2136, 0.0
    %2141 = vadd.xlane.f32.xlu0 %v2140
    %v2142 = vpop.xlane.xlu0 %2141
    %v2143 = vsel %vm57, %v2137, 0.0
    %2144 = vadd.xlane.f32.xlu0 %v2143
    %v2145 = vpop.xlane.xlu0 %2144
    %v2146 = vsel %vm57, %v2138, 0.0
    %2147 = vadd.xlane.f32.xlu0 %v2146
    %v2148 = vpop.xlane.xlu0 %2147
    %v2149 = vsel %vm57, %v2139, 0.0
    %2150 = vadd.xlane.f32.xlu0 %v2149
    %v2151 = vpop.xlane.xlu0 %2150
    %v2152 = vmul.f32 %v2142, %v70
    %v2153 = vmul.f32 %v2145, %v70
    %v2154 = vmul.f32 %v2148, %v70
    %v2155 = vmul.f32 %v2151, %v70
    %v2156 = vadd.f32 %v2152, 1e-05
    %v2157 = vadd.f32 %v2153, 1e-05
    %v2158 = vadd.f32 %v2154, 1e-05
    %v2159 = vadd.f32 %v2155, 1e-05
    %v2160 = vrsqrt.pop %v2156
    %v2161 = vrsqrt.pop %v2157
    %v2162 = vrsqrt.pop %v2158
    %v2163 = vrsqrt.pop %v2159
    %v2164 = vmul.f32 %v2132, %v2160
    %v2165 = vmul.f32 %v2133, %v2161
    %v2166 = vmul.f32 %v2134, %v2162
    %v2167 = vmul.f32 %v2135, %v2163
    %v2168 = vlaneseq
    %v2169 = vshrl.u32 %v2168, 7
    %v2170 = vsub.s32 2, %v2169
    %v2171 = vrot.slane %v56, %v2170
    %v2172 = vmul.f32 %v2164, %v2171
    %v2173 = vmul.f32 %v2165, %v2171
    %v2174 = vmul.f32 %v2166, %v2171
    %v2175 = vmul.f32 %v2167, %v2171
    %v2176 = vlaneseq
    %v2177 = vshrl.u32 %v2176, 7
    %v2178 = vsub.s32 3, %v2177
    %v2179 = vrot.slane %v56, %v2178
    %v2180 = vadd.f32 %v2172, %v2179
    %v2181 = vadd.f32 %v2173, %v2179
    %v2182 = vadd.f32 %v2174, %v2179
    %v2183 = vadd.f32 %v2175, %v2179
    %v2184 = vpack.c.bf16 %v2181, %v2180
    %v2185 = vpack.c.bf16 %v2183, %v2182
    %v2186 = vld [vmem:[%s7] sm:$0xf]
    %v2187 = vld [vmem:[%s7 + $0x4] sm:$0xf]
    %v2188 = vld [vmem:[%s7 + $0x8] sm:$0xf]
    %v2189 = vld [vmem:[%s7 + $0xc] sm:$0xf]
    %v2190 = vld [vmem:[%s8] sm:$0x1]
    %v2192 = vlaneseq
    %v2193 = vshrl.u32 %v2192, 7
    %v2194 = vsub.s32 0, %v2193
    %v2195 = vrot.slane %v2190, %v2194
    %v2201 = vunpack.c.l.b16 %v2186
    %v2202 = vunpack.c.l.b16 %v2187
    %v2203 = vunpack.c.l.b16 %v2188
    %v2204 = vunpack.c.l.b16 %v2189
    %v2205 = vpack.c.b16 %v2202, %v2201
    %v2206 = vpack.c.b16 %v2204, %v2203
    %v2210 = vsel %vm57, %v2184, 0
    %v2213 = vsel %vm57, %v2185, 0
    %2215 = vmatprep.subr.bf16.mxu0 0
    %2216 = vmatpush1.bf16.msra.mxu0 %v2205
    %2217 = vmatprep.subr.bf16.mxu0 0
    %2218 = vmatpush1.bf16.msra.mxu0 %v2206
    %2219 = vmatprep.subr.bf16.mxu0 0
    %2220 = vmatpush1.bf16.msra.mxu0 0
    %2221 = vmatprep.subr.bf16.mxu0 0
    %2222 = vmatpush1.bf16.msra.mxu0 0
    %2223 = vmatprep.subr.bf16.mxu0 0
    %2224 = vmatpush1.bf16.msra.mxu0 0
    %2225 = vmatprep.subr.bf16.mxu0 0
    %2226 = vmatpush1.bf16.msra.mxu0 0
    %2227 = vmatprep.subr.bf16.mxu0 0
    %2228 = vmatpush1.bf16.msra.mxu0 0
    %2229 = vmatprep.subr.bf16.mxu0 0
    %2230 = vmatpush1.bf16.msra.mxu0 0
    %2231 = vmatprep.subr.bf16.mxu0 0
    %2232 = vmatpush1.bf16.msra.mxu0 0
    %2233 = vmatprep.subr.bf16.mxu0 0
    %2234 = vmatpush1.bf16.msra.mxu0 0
    %2235 = vmatprep.subr.bf16.mxu0 0
    %2236 = vmatpush1.bf16.msra.mxu0 0
    %2237 = vmatprep.subr.bf16.mxu0 0
    %2238 = vmatpush1.bf16.msra.mxu0 0
    %2239 = vmatprep.subr.bf16.mxu0 0
    %2240 = vmatpush1.bf16.msra.mxu0 0
    %2241 = vmatprep.subr.bf16.mxu0 0
    %2242 = vmatpush1.bf16.msra.mxu0 0
    %2243 = vmatprep.subr.bf16.mxu0 0
    %2244 = vmatpush1.bf16.msra.mxu0 0
    %2245 = vmatprep.subr.bf16.mxu0 0
    %2246 = vmatpush1.bf16.msra.mxu0 0
    %2247 = vmatprep.mubr.bf16.mxu0 0
    %2248 = vmatmul.mubr.bf16.gmra.mrb[0].mxu0 %v2210
    %v2249 = vpop.f32.mrb[0].mxu0
    %v2250 = vadd.f32 %v2195, %v2249
    %v2251 = vpop.f32.mrb[0].mxu0
    %v2252 = vpop.f32.mrb[0].mxu0
    %v2253 = vadd.f32 %v2195, %v2252
    %v2254 = vpop.f32.mrb[0].mxu0
    %2255 = vmatprep.mubr.bf16.mxu0 0
    %2256 = vmatmul.mubr.bf16.gmra.mrb[0].mxu0 %v2213
    %v2257 = vpop.f32.mrb[0].mxu0
    %v2258 = vadd.f32 %v2195, %v2257
    %v2259 = vpop.f32.mrb[0].mxu0
    %v2260 = vpop.f32.mrb[0].mxu0
    %v2261 = vadd.f32 %v2195, %v2260
    %v2262 = vpop.f32.mrb[0].mxu0
    %2263 = vdwg.mxu0
    %v2264 = vmul.f32 %v2250, 0.5
    %v2265 = vmul.f32 %v2253, 0.5
    %v2266 = vmul.f32 %v2258, 0.5
    %v2267 = vmul.f32 %v2261, 0.5
    %v2268 = vmul.f32 %v2250, 0.044715
    %v2269 = vmul.f32 %v2253, 0.044715
    %v2270 = vmul.f32 %v2258, 0.044715
    %v2271 = vmul.f32 %v2261, 0.044715
    %v2272 = vmul.f32 %v2268, %v2250
    %v2273 = vmul.f32 %v2269, %v2253
    %v2274 = vmul.f32 %v2270, %v2258
    %v2275 = vmul.f32 %v2271, %v2261
    %v2276 = vmul.f32 %v2272, %v2250
    %v2277 = vmul.f32 %v2273, %v2253
    %v2278 = vmul.f32 %v2274, %v2258
    %v2279 = vmul.f32 %v2275, %v2261
    %v2280 = vadd.f32 %v2250, %v2276
    %v2281 = vadd.f32 %v2253, %v2277
    %v2282 = vadd.f32 %v2258, %v2278
    %v2283 = vadd.f32 %v2261, %v2279
    %v2284 = vmul.f32 %v2280, 0.7978846
    %v2285 = vmul.f32 %v2281, 0.7978846
    %v2286 = vmul.f32 %v2282, 0.7978846
    %v2287 = vmul.f32 %v2283, 0.7978846
    %v2288 = vtanh.pop %v2284
    %v2289 = vtanh.pop %v2285
    %v2290 = vtanh.pop %v2286
    %v2291 = vtanh.pop %v2287
    %v2292 = vadd.f32 %v2288, 1.0
    %v2293 = vadd.f32 %v2289, 1.0
    %v2294 = vadd.f32 %v2290, 1.0
    %v2295 = vadd.f32 %v2291, 1.0
    %v2296 = vmul.f32 %v2264, %v2292
    %v2297 = vmul.f32 %v2265, %v2293
    %v2298 = vmul.f32 %v2266, %v2294
    %v2299 = vmul.f32 %v2267, %v2295
    %v2300 = vpack.c.bf16 %v2297, %v2296
    %v2301 = vpack.c.bf16 %v2299, %v2298
    %v2302 = vld [vmem:[%s9] sm:$0xf]
    %v2303 = vld [vmem:[%s9 + $0x4] sm:$0xf]
    %v2304 = vld [vmem:[%s9 + $0x8] sm:$0xf]
    %v2305 = vld [vmem:[%s9 + $0xc] sm:$0xf]
    %v2306 = vld [vmem:[%s9 + $0x10] sm:$0xf]
    %v2307 = vld [vmem:[%s9 + $0x14] sm:$0xf]
    %v2308 = vld [vmem:[%s9 + $0x18] sm:$0xf]
    %v2309 = vld [vmem:[%s9 + $0x1c] sm:$0xf]
    %v2310 = vld [vmem:[%s9 + $0x20] sm:$0xf]
    %v2311 = vld [vmem:[%s9 + $0x24] sm:$0xf]
    %v2312 = vld [vmem:[%s9 + $0x28] sm:$0xf]
    %v2313 = vld [vmem:[%s9 + $0x2c] sm:$0xf]
    %v2314 = vld [vmem:[%s9 + $0x30] sm:$0xf]
    %v2315 = vld [vmem:[%s9 + $0x34] sm:$0xf]
    %v2316 = vld [vmem:[%s9 + $0x38] sm:$0xf]
    %v2317 = vld [vmem:[%s9 + $0x3c] sm:$0xf]
    %v2318 = vld [vmem:[%s10] sm:$0x1]
    %v2320 = vlaneseq
    %v2321 = vshrl.u32 %v2320, 7
    %v2322 = vsub.s32 0, %v2321
    %v2323 = vrot.slane %v2318, %v2322
    %v2341 = vunpack.c.l.b16 %v2302
    %v2342 = vunpack.c.l.b16 %v2303
    %v2343 = vunpack.c.l.b16 %v2304
    %v2344 = vunpack.c.l.b16 %v2305
    %v2345 = vunpack.c.l.b16 %v2306
    %v2346 = vunpack.c.l.b16 %v2307
    %v2347 = vunpack.c.l.b16 %v2308
    %v2348 = vunpack.c.l.b16 %v2309
    %v2349 = vunpack.c.l.b16 %v2310
    %v2350 = vunpack.c.l.b16 %v2311
    %v2351 = vunpack.c.l.b16 %v2312
    %v2352 = vunpack.c.l.b16 %v2313
    %v2353 = vunpack.c.l.b16 %v2314
    %v2354 = vunpack.c.l.b16 %v2315
    %v2355 = vunpack.c.l.b16 %v2316
    %v2356 = vunpack.c.l.b16 %v2317
    %v2357 = vpack.c.b16 %v2342, %v2341
    %v2358 = vpack.c.b16 %v2344, %v2343
    %v2359 = vpack.c.b16 %v2346, %v2345
    %v2360 = vpack.c.b16 %v2348, %v2347
    %v2361 = vpack.c.b16 %v2350, %v2349
    %v2362 = vpack.c.b16 %v2352, %v2351
    %v2363 = vpack.c.b16 %v2354, %v2353
    %v2364 = vpack.c.b16 %v2356, %v2355
    %2373 = vmatprep.subr.bf16.mxu0 0
    %2374 = vmatpush1.bf16.msra.mxu0 %v2357
    %2375 = vmatprep.subr.bf16.mxu0 0
    %2376 = vmatpush1.bf16.msra.mxu0 %v2358
    %2377 = vmatprep.subr.bf16.mxu0 0
    %2378 = vmatpush1.bf16.msra.mxu0 %v2359
    %2379 = vmatprep.subr.bf16.mxu0 0
    %2380 = vmatpush1.bf16.msra.mxu0 %v2360
    %2381 = vmatprep.subr.bf16.mxu0 0
    %2382 = vmatpush1.bf16.msra.mxu0 %v2361
    %2383 = vmatprep.subr.bf16.mxu0 0
    %2384 = vmatpush1.bf16.msra.mxu0 %v2362
    %2385 = vmatprep.subr.bf16.mxu0 0
    %2386 = vmatpush1.bf16.msra.mxu0 %v2363
    %2387 = vmatprep.subr.bf16.mxu0 0
    %2388 = vmatpush1.bf16.msra.mxu0 %v2364
    %2389 = vmatprep.subr.bf16.mxu0 0
    %2390 = vmatpush1.bf16.msra.mxu0 0
    %2391 = vmatprep.subr.bf16.mxu0 0
    %2392 = vmatpush1.bf16.msra.mxu0 0
    %2393 = vmatprep.subr.bf16.mxu0 0
    %2394 = vmatpush1.bf16.msra.mxu0 0
    %2395 = vmatprep.subr.bf16.mxu0 0
    %2396 = vmatpush1.bf16.msra.mxu0 0
    %2397 = vmatprep.subr.bf16.mxu0 0
    %2398 = vmatpush1.bf16.msra.mxu0 0
    %2399 = vmatprep.subr.bf16.mxu0 0
    %2400 = vmatpush1.bf16.msra.mxu0 0
    %2401 = vmatprep.subr.bf16.mxu0 0
    %2402 = vmatpush1.bf16.msra.mxu0 0
    %2403 = vmatprep.subr.bf16.mxu0 0
    %2404 = vmatpush1.bf16.msra.mxu0 0
    %2405 = vmatprep.mubr.bf16.mxu0 0
    %2406 = vmatmul.mubr.bf16.gmra.mrb[0].mxu0 %v2300
    %v2407 = vpop.f32.mrb[0].mxu0
    %v2408 = vadd.f32 %v2323, %v2407
    %v2409 = vpop.f32.mrb[0].mxu0
    %v2410 = vpop.f32.mrb[0].mxu0
    %v2411 = vadd.f32 %v2323, %v2410
    %v2412 = vpop.f32.mrb[0].mxu0
    %2413 = vmatprep.mubr.bf16.mxu0 0
    %2414 = vmatmul.mubr.bf16.gmra.mrb[0].mxu0 %v2301
    %v2415 = vpop.f32.mrb[0].mxu0
    %v2416 = vadd.f32 %v2323, %v2415
    %v2417 = vpop.f32.mrb[0].mxu0
    %v2418 = vpop.f32.mrb[0].mxu0
    %v2419 = vadd.f32 %v2323, %v2418
    %v2420 = vpop.f32.mrb[0].mxu0
    %2421 = vdwg.mxu0
    %v2422 = vadd.f32 %v2112, %v2408
    %v2423 = vadd.f32 %v2113, %v2411
    %v2424 = vadd.f32 %v2114, %v2416
    %v2425 = vadd.f32 %v2115, %v2419
    %2426 = vst.msk [vmem:[#allocation5] sm:$0xff] %vm57, %v2422
    %2427 = vst.msk [vmem:[#allocation5 + $0x8] sm:$0xff] %vm57, %v2423
    %2428 = vst.msk [vmem:[#allocation5 + $0x10] sm:$0xff] %vm57, %v2424
    %2429 = vst.msk [vmem:[#allocation5 + $0x18] sm:$0xff] %vm57, %v2425
    // Predicated region
    $region50: #{tpu_custom_call.1} parent=1 // pred_check
      _
    $region51: #{tpu_custom_call.1} parent=1 // pred_check_branch
      %2431 = sbr.rel (0) target = $region53
    $region52: #{tpu_custom_call.1} parent=1 // pred_region
      %s2433 = ssub.s32 512, 512
      %2434 = vsyncadd [#allocation4], %s2433
      %s2435 = sshll.u32 [#allocation5], 4
      %s2436 = int_to_ptr.vmem [resolvable:$true] %s2435
      %2441 = dma.vmem_to_hbm [thread:$0]  %s2436, 512, %s11, [#allocation4], 128, 128, 8
    $region53: #{tpu_custom_call.1} parent=1 // pred_fallthru
      _
    // Predicated region
    $region54: #{tpu_custom_call.1} parent=1 // pred_check
      _
    $region55: #{tpu_custom_call.1} parent=1 // pred_check_branch
      %2443 = sbr.rel (0) target = $region57
    $region56: #{tpu_custom_call.1} parent=1 // pred_region
      %2444 = dma.done [#allocation4], 512
    $region57: #{tpu_custom_call.1} parent=1 // pred_fallthru
      _
    %2445 = vsyncpa [#allocation3], 1
    %2446 = vsyncpa [#allocation4], 1

</llo_original>
